<compile_context>
chip_gen: v6e
topology: v6e:2x2x1
jax: 0.10.0
libtpu: 0.0.40
codegen_flags: <defaults>
</compile_context>

<pallas_src>
import numpy as np
import jax
import jax.numpy as jnp
from jax.experimental import pallas as pl
from jax.experimental.pallas import tpu as pltpu

NEG_SLOPE = 0.01        # torch.nn.LeakyReLU default negative_slope
SLOTS = 5               # letters per word
VOCAB = 26
V_PAD = 32              # per-slot vocab rows, padded (block-diag embedding matmul)
D_PAD = 128             # padded feature / hidden dim (d=40, d*mf=80 -> 128)
HALF = 64               # lane offset of the "gathered" half in the fused combine
OH_W = SLOTS * V_PAD    # 160 one-hot lanes

N_W_PER_BLOCK = 5       # w1p, w2p, w1g, w2g(shifted), wc(fused)
N_B_PER_BLOCK = 5       # b1p, b2p, b1g, b2g(shifted), bc


def _leaky(x):
    return jnp.where(x >= 0, x, NEG_SLOPE * x)


# ---------------------------------------------------------------------------
# Fused Pallas kernel: embedding -> [pointNet_block]*layers -> head
# ---------------------------------------------------------------------------
def _make_kernel(layers):
    def kernel(oh_ref, wemb_ref, w_ref, b_ref, seg_ref, gat_ref,
               lg2_ref, wsc_ref, out_ref):
        f32 = jnp.float32
        bf16 = jnp.bfloat16

        # ---- embedding: host-built one-hot (N_PAD, 160) @ block-diag (160, 128)
        x = jnp.dot(oh_ref[...], wemb_ref[...],
                    preferred_element_type=f32)                       # (N_PAD, D_PAD) f32

        seg = seg_ref[...]                                            # (B_PAD, N_PAD) bf16
        gat = gat_ref[...]                                            # (N_PAD, B_PAD) bf16

        # ---- pointNet_block layers (unrolled; Dropout = identity in eval mode)
        for l in range(layers):
            wo = l * N_W_PER_BLOCK
            bo = l * N_B_PER_BLOCK
            # point_update MLP
            h = _leaky(jnp.dot(x.astype(bf16), w_ref[wo + 0],
                               preferred_element_type=f32)
                       + b_ref[bo + 0:bo + 1, :].astype(f32))
            out_p = _leaky(jnp.dot(h.astype(bf16), w_ref[wo + 1],
                                   preferred_element_type=f32)
                           + b_ref[bo + 1:bo + 2, :].astype(f32))     # lanes 0:d
            # segment_csr(out, all2seg, reduce='mean')  ==  seg_mat @ out_p
            g = jnp.dot(seg, out_p.astype(bf16), preferred_element_type=f32)
            # group_update MLP (w2g columns pre-shifted to lanes HALF:HALF+d)
            hg = _leaky(jnp.dot(g.astype(bf16), w_ref[wo + 2],
                                preferred_element_type=f32)
                        + b_ref[bo + 2:bo + 3, :].astype(f32))
            out_g = _leaky(jnp.dot(hg.astype(bf16), w_ref[wo + 3],
                                   preferred_element_type=f32)
                           + b_ref[bo + 3:bo + 4, :].astype(f32))     # lanes HALF:HALF+d
            # out_group[seg2all]  ==  gather_mat @ out_g  (still lanes HALF:HALF+d)
            gathered = jnp.dot(gat, out_g.astype(bf16), preferred_element_type=f32)
            # cat([out_p, gathered], 1) == lane-disjoint add; combine == ONE matmul
            packed = (out_p + gathered).astype(bf16)
            comb = (jnp.dot(packed, w_ref[wo + 4], preferred_element_type=f32)
                    + b_ref[bo + 4:bo + 5, :].astype(f32))
            x = _leaky(comb) + x

        # ---- head: segment mean -> out_linear MLP -> + w * log2(length)
        wo = layers * N_W_PER_BLOCK
        bo = layers * N_B_PER_BLOCK
        g = jnp.dot(seg, x.astype(bf16), preferred_element_type=f32)  # (B_PAD, D_PAD)
        h = _leaky(jnp.dot(g.astype(bf16), w_ref[wo + 0],
                           preferred_element_type=f32)
                   + b_ref[bo + 0:bo + 1, :].astype(f32))
        y = _leaky(jnp.dot(h.astype(bf16), w_ref[wo + 1],
                           preferred_element_type=f32)
                   + b_ref[bo + 1:bo + 2, :].astype(f32))             # column 0 = real output
        out_ref[...] = y + wsc_ref[0] * lg2_ref[...]                  # log2(len) precomputed host-side

    return kernel


@jax.jit
def pointnet_forward(one_hot, w_emb, weights, biases, seg, gat, log2len, w_scalar):
    g_calls, n_pad, oh_w = one_hot.shape
    n_w = weights.shape[0]
    n_b = biases.shape[0]
    b_pad = seg.shape[1]
    layers = (n_w - 2) // N_W_PER_BLOCK
    return pl.pallas_call(
        _make_kernel(layers),
        out_shape=jax.ShapeDtypeStruct((g_calls, b_pad, D_PAD), jnp.float32),
        grid=(g_calls,),
        in_specs=[
            pl.BlockSpec((None, n_pad, oh_w), lambda g: (g, 0, 0)),        # per-call one-hot
            pl.BlockSpec((oh_w, D_PAD), lambda g: (0, 0)),                 # w_emb (resident)
            pl.BlockSpec((n_w, D_PAD, D_PAD), lambda g: (0, 0, 0)),        # weights (resident)
            pl.BlockSpec((n_b, D_PAD), lambda g: (0, 0)),                  # biases (resident)
            pl.BlockSpec((None, b_pad, n_pad), lambda g: (g, 0, 0)),       # seg (mean reduce)
            pl.BlockSpec((None, n_pad, b_pad), lambda g: (g, 0, 0)),       # gather
            pl.BlockSpec((None, b_pad, D_PAD), lambda g: (g, 0, 0)),       # log2(length), lane-bcast
            pl.BlockSpec(memory_space=pltpu.MemorySpace.SMEM),             # learnable scalar w
        ],
        out_specs=pl.BlockSpec((None, b_pad, D_PAD), lambda g: (g, 0, 0)),
        compiler_params=pltpu.CompilerParams(
            dimension_semantics=("parallel",)),                            # 2nd TC on v7x
    )(one_hot, w_emb, weights, biases, seg, gat, log2len, w_scalar)


# ---------------------------------------------------------------------------
# Deterministic torch.nn.Linear-style init (stored in (in, out) layout)
# ---------------------------------------------------------------------------
def init_linear(key, in_d, out_d):
    kw, kb = jax.random.split(key)
    bound = 1.0 / np.sqrt(in_d)
    w = jax.random.uniform(kw, (in_d, out_d), jnp.float32, -bound, bound)
    b = jax.random.uniform(kb, (out_d,), jnp.float32, -bound, bound)
    return w, b


def init_block(key, d, mf):
    ks = jax.random.split(key, 5)
    w1p, b1p = init_linear(ks[0], d, d * mf)
    w2p, b2p = init_linear(ks[1], d * mf, d)
    w1g, b1g = init_linear(ks[2], d, d * mf)
    w2g, b2g = init_linear(ks[3], d * mf, d)
    wc, bc = init_linear(ks[4], 2 * d, d)
    return dict(w1p=w1p, b1p=b1p, w2p=w2p, b2p=b2p,
                w1g=w1g, b1g=b1g, w2g=w2g, b2g=b2g, wc=wc, bc=bc)


# ---------------------------------------------------------------------------
# Host-side packing / zero-padding of all parameters (one-time) -> bf16
# ---------------------------------------------------------------------------
def _pad_mat(w, row_off=0, col_off=0):
    out = np.zeros((D_PAD, D_PAD), np.float32)
    wn = np.asarray(w)
    out[row_off:row_off + wn.shape[0], col_off:col_off + wn.shape[1]] = wn
    return out


def _pad_vec(b, off=0):
    out = np.zeros((D_PAD,), np.float32)
    bn = np.asarray(b)
    out[off:off + bn.shape[0]] = bn
    return out


def pack_params(emb_tbl, block_params, head_params, embed_size, d):
    assert d <= HALF, "fused-combine lane packing requires d <= 64"
    w_list, b_list = [], []
    for p in block_params:
        wc = np.asarray(p["wc"])                        # (2d, d)
        # fused combine weight: rows 0:d act on out_p lanes, rows HALF:HALF+d on gathered lanes
        wc_f = np.zeros((D_PAD, D_PAD), np.float32)
        wc_f[:d, :d] = wc[:d]
        wc_f[HALF:HALF + d, :d] = wc[d:]
        w_list += [_pad_mat(p["w1p"]), _pad_mat(p["w2p"]), _pad_mat(p["w1g"]),
                   _pad_mat(p["w2g"], col_off=HALF),    # out_g lands in lanes HALF:HALF+d
                   wc_f]
        b_list += [_pad_vec(p["b1p"]), _pad_vec(p["b2p"]), _pad_vec(p["b1g"]),
                   _pad_vec(p["b2g"], off=HALF), _pad_vec(p["bc"])]
    w_list += [_pad_mat(head_params["w1"]), _pad_mat(head_params["w2"])]
    b_list += [_pad_vec(head_params["b1"]), _pad_vec(head_params["b2"])]
    weights = jnp.asarray(np.stack(w_list), dtype=jnp.bfloat16)   # (layers*5+2, 128, 128)
    biases = jnp.asarray(np.stack(b_list), dtype=jnp.bfloat16)    # (layers*5+2, 128)

    # Block-diagonal embedding matrix: one_hot(N,160) @ w_emb(160,128) == cat of 5 gathers
    emb_np = np.asarray(emb_tbl)
    w_emb = np.zeros((OH_W, D_PAD), np.float32)
    for j in range(SLOTS):
        w_emb[j * V_PAD:j * V_PAD + VOCAB, j * embed_size:(j + 1) * embed_size] = emb_np
    return weights, biases, jnp.asarray(w_emb, dtype=jnp.bfloat16)


# ---------------------------------------------------------------------------
# Pure-JAX reference (unpadded, f32) for correctness checking
# ---------------------------------------------------------------------------
def reference_forward(words, lengths, emb_tbl, block_params, head_params, w_scalar):
    n = words.shape[0]
    b = lengths.shape[0]
    seg2all = np.repeat(np.arange(b), lengths)
    seg_mat = np.zeros((b, n), np.float32)
    seg_mat[seg2all, np.arange(n)] = 1.0 / lengths[seg2all]
    seg_mat = jnp.asarray(seg_mat)
    x = emb_tbl[words].reshape(n, -1)
    for p in block_params:
        h = _leaky(x @ p["w1p"] + p["b1p"])
        out_p = _leaky(h @ p["w2p"] + p["b2p"])
        g = seg_mat @ out_p
        hg = _leaky(g @ p["w1g"] + p["b1g"])
        out_g = _leaky(hg @ p["w2g"] + p["b2g"])
        gathered = out_g[jnp.asarray(seg2all)]
        x = _leaky(jnp.concatenate([out_p, gathered], axis=1) @ p["wc"] + p["bc"]) + x
    g = seg_mat @ x
    h = _leaky(g @ head_params["w1"] + head_params["b1"])
    y = _leaky(h @ head_params["w2"] + head_params["b2"])
    return y[:, 0] + w_scalar[0] * jnp.log2(lengths.astype(jnp.float32))


# ---------------------------------------------------------------------------
if __name__ == "__main__":
    key = jax.random.PRNGKey(0)
    embed_size = 8
    layers = 2
    mf = 2                                   # multiple_factor
    d = embed_size * SLOTS                   # 40  (self.d = embed_size * 5)
    # agg = 'mean'
    G = 4                                    # independent inference calls batched under the grid

    keys = jax.random.split(key, 4 + layers)
    emb_tbl = jax.random.normal(keys[0], (VOCAB, embed_size), jnp.float32)   # Embedding(26, e)
    block_params = [init_block(keys[1 + i], d, mf) for i in range(layers)]
    w1o, b1o = init_linear(keys[1 + layers], d, d * mf)
    w2o, b2o = init_linear(keys[2 + layers], d * mf, 1)
    head_params = dict(w1=w1o, b1=b1o, w2=w2o, b2=b2o)
    w_scalar = jnp.array([0.13663686], dtype=jnp.float32)                    # self.w

    # per-call problems: B=2 groups, N=8 points each (variable group lengths)
    lengths_all = [np.array([3, 5], np.int32), np.array([4, 4], np.int32),
                   np.array([2, 6], np.int32), np.array([5, 3], np.int32)]
    B, N = 2, 8
    N_PAD = max(8, ((N + 7) // 8) * 8)
    B_PAD = max(8, ((B + 7) // 8) * 8)
    word_keys = jax.random.split(keys[3 + layers], G)
    words_all = [jax.random.randint(word_keys[i], (N, SLOTS), 0, VOCAB) for i in range(G)]

    # ---- pack/pad parameters into 3 resident device buffers (host side, one-time) ----
    weights, biases, w_emb = pack_params(emb_tbl, block_params, head_params, embed_size, d)

    # ---- per-call input prep: one-hot rows, segment/gather matrices, log2(length) ----
    oh_np = np.zeros((G, N_PAD, OH_W), np.float32)
    seg_np = np.zeros((G, B_PAD, N_PAD), np.float32)
    gat_np = np.zeros((G, N_PAD, B_PAD), np.float32)
    lg2_np = np.zeros((G, B_PAD, D_PAD), np.float32)
    for g in range(G):
        w_np = np.asarray(words_all[g])
        lengths = lengths_all[g]
        for j in range(SLOTS):
            oh_np[g, np.arange(N), j * V_PAD + w_np[:, j]] = 1.0
        seg2all = np.repeat(np.arange(B), lengths)
        seg_np[g, seg2all, np.arange(N)] = 1.0 / lengths[seg2all]            # mean reduce
        gat_np[g, np.arange(N), seg2all] = 1.0                               # group broadcast
        lg2_np[g, :B, :] = np.log2(lengths.astype(np.float32))[:, None]      # lane-broadcast

    out_pad = pointnet_forward(jnp.asarray(oh_np, jnp.bfloat16), w_emb, weights, biases,
                               jnp.asarray(seg_np, jnp.bfloat16),
                               jnp.asarray(gat_np, jnp.bfloat16),
                               jnp.asarray(lg2_np), w_scalar)
    jax.block_until_ready(out_pad)
    q = np.asarray(out_pad)[:, :B, 0]        # (G, B): .squeeze() of each (B,1) head output

    # correctness check against a pure-JAX f32 reference (bf16-weight tolerance)
    assert q.shape == (G, B)
    assert np.all(np.isfinite(q))
    for g in range(G):
        q_ref = reference_forward(np.asarray(words_all[g]), lengths_all[g], emb_tbl,
                                  block_params, head_params, w_scalar)
        np.testing.assert_allclose(q[g], np.asarray(q_ref), rtol=1e-1, atol=1e-1)
    print("KERNEL_OK")
</pallas_src>

<mosaic_0001>
module attributes {stable_mosaic.version = 11 : i64} {
  func.func @kernel(%arg0: i32, %arg1: memref<1x8x160xbf16, #tpu.memory_space<vmem>>, %arg2: memref<160x128xbf16, #tpu.memory_space<vmem>>, %arg3: memref<12x128x128xbf16, #tpu.memory_space<vmem>>, %arg4: memref<12x128xbf16, #tpu.memory_space<vmem>>, %arg5: memref<1x8x8xbf16, #tpu.memory_space<vmem>>, %arg6: memref<1x8x8xbf16, #tpu.memory_space<vmem>>, %arg7: memref<1x8x128xf32, #tpu.memory_space<vmem>>, %arg8: memref<1xf32, #tpu.memory_space<smem>>, %arg9: memref<1x8x128xf32, #tpu.memory_space<vmem>>) attributes {dimension_semantics = [#tpu.dimension_semantics<parallel>], iteration_bounds = array<i64: 4>, scalar_prefetch = 0 : i64, scratch_operands = 0 : i64, tpu.core_type = #tpu.core_type<tc>, window_params = [{transform_indices = @transform_0, window_bounds = array<i64: 1, 8, 160>}, {pipeline_mode = #tpu.pipeline_mode<synchronous>, transform_indices = @transform_1, window_bounds = array<i64: 160, 128>}, {pipeline_mode = #tpu.pipeline_mode<synchronous>, transform_indices = @transform_2, window_bounds = array<i64: 12, 128, 128>}, {pipeline_mode = #tpu.pipeline_mode<synchronous>, transform_indices = @transform_3, window_bounds = array<i64: 12, 128>}, {transform_indices = @transform_4, window_bounds = array<i64: 1, 8, 8>}, {transform_indices = @transform_5, window_bounds = array<i64: 1, 8, 8>}, {transform_indices = @transform_6, window_bounds = array<i64: 1, 8, 128>}, {transform_indices = @transform_7, window_bounds = array<i64: 1>}, {transform_indices = @transform_8, window_bounds = array<i64: 1, 8, 128>}]} {
    %c0 = arith.constant 0 : index
    %c0_0 = arith.constant 0 : index
    %c0_1 = arith.constant 0 : index
    %0 = vector.load %arg1[%c0, %c0_0, %c0_1] : memref<1x8x160xbf16, #tpu.memory_space<vmem>>, vector<1x8x160xbf16>
    %1 = vector.shape_cast %0 : vector<1x8x160xbf16> to vector<8x160xbf16>
    %c0_2 = arith.constant 0 : index
    %c0_3 = arith.constant 0 : index
    %2 = vector.load %arg2[%c0_2, %c0_3] : memref<160x128xbf16, #tpu.memory_space<vmem>>, vector<160x128xbf16>
    %cst = arith.constant dense<0.000000e+00> : vector<8x128xf32>
    %3 = tpu.matmul %1, %2, %cst {dimension_numbers = #tpu.dot_dimension_numbers<[1], [0], [0], [1], [0, 0, 1, 1], [], []>} : vector<8x160xbf16>, vector<160x128xbf16>, vector<8x128xf32> -> vector<8x128xf32>
    %c0_4 = arith.constant 0 : index
    %c0_5 = arith.constant 0 : index
    %c0_6 = arith.constant 0 : index
    %4 = vector.load %arg5[%c0_4, %c0_5, %c0_6] : memref<1x8x8xbf16, #tpu.memory_space<vmem>>, vector<1x8x8xbf16>
    %5 = vector.shape_cast %4 : vector<1x8x8xbf16> to vector<8x8xbf16>
    %c0_7 = arith.constant 0 : index
    %c0_8 = arith.constant 0 : index
    %c0_9 = arith.constant 0 : index
    %6 = vector.load %arg6[%c0_7, %c0_8, %c0_9] : memref<1x8x8xbf16, #tpu.memory_space<vmem>>, vector<1x8x8xbf16>
    %7 = vector.shape_cast %6 : vector<1x8x8xbf16> to vector<8x8xbf16>
    %8 = arith.truncf %3 : vector<8x128xf32> to vector<8x128xbf16>
    %c0_10 = arith.constant 0 : index
    %c0_11 = arith.constant 0 : index
    %c0_12 = arith.constant 0 : index
    %9 = vector.load %arg3[%c0_10, %c0_11, %c0_12] : memref<12x128x128xbf16, #tpu.memory_space<vmem>>, vector<1x128x128xbf16>
    %10 = vector.shape_cast %9 : vector<1x128x128xbf16> to vector<128x128xbf16>
    %cst_13 = arith.constant dense<0.000000e+00> : vector<8x128xf32>
    %11 = tpu.matmul %8, %10, %cst_13 {dimension_numbers = #tpu.dot_dimension_numbers<[1], [0], [0], [1], [0, 0, 1, 1], [], []>} : vector<8x128xbf16>, vector<128x128xbf16>, vector<8x128xf32> -> vector<8x128xf32>
    %c0_14 = arith.constant 0 : index
    %c0_15 = arith.constant 0 : index
    %12 = vector.load %arg4[%c0_14, %c0_15] : memref<12x128xbf16, #tpu.memory_space<vmem>>, vector<1x128xbf16>
    %13 = arith.extf %12 : vector<1x128xbf16> to vector<1x128xf32>
    %14 = vector.broadcast %13 : vector<1x128xf32> to vector<8x128xf32>
    %15 = arith.addf %11, %14 : vector<8x128xf32>
    %cst_16 = arith.constant 0.000000e+00 : f32
    %16 = vector.broadcast %cst_16 : f32 to vector<8x128xf32>
    %17 = arith.cmpf oge, %15, %16 : vector<8x128xf32>
    %cst_17 = arith.constant 0.00999999977 : f32
    %18 = vector.broadcast %cst_17 : f32 to vector<8x128xf32>
    %19 = arith.mulf %18, %15 : vector<8x128xf32>
    %20 = arith.select %17, %15, %19 : vector<8x128xi1>, vector<8x128xf32>
    %21 = arith.truncf %20 : vector<8x128xf32> to vector<8x128xbf16>
    %c1 = arith.constant 1 : index
    %c0_18 = arith.constant 0 : index
    %c0_19 = arith.constant 0 : index
    %22 = vector.load %arg3[%c1, %c0_18, %c0_19] : memref<12x128x128xbf16, #tpu.memory_space<vmem>>, vector<1x128x128xbf16>
    %23 = vector.shape_cast %22 : vector<1x128x128xbf16> to vector<128x128xbf16>
    %cst_20 = arith.constant dense<0.000000e+00> : vector<8x128xf32>
    %24 = tpu.matmul %21, %23, %cst_20 {dimension_numbers = #tpu.dot_dimension_numbers<[1], [0], [0], [1], [0, 0, 1, 1], [], []>} : vector<8x128xbf16>, vector<128x128xbf16>, vector<8x128xf32> -> vector<8x128xf32>
    %c1_21 = arith.constant 1 : index
    %c0_22 = arith.constant 0 : index
    %25 = vector.load %arg4[%c1_21, %c0_22] : memref<12x128xbf16, #tpu.memory_space<vmem>>, vector<1x128xbf16>
    %26 = arith.extf %25 : vector<1x128xbf16> to vector<1x128xf32>
    %27 = vector.broadcast %26 : vector<1x128xf32> to vector<8x128xf32>
    %28 = arith.addf %24, %27 : vector<8x128xf32>
    %cst_23 = arith.constant 0.000000e+00 : f32
    %29 = vector.broadcast %cst_23 : f32 to vector<8x128xf32>
    %30 = arith.cmpf oge, %28, %29 : vector<8x128xf32>
    %cst_24 = arith.constant 0.00999999977 : f32
    %31 = vector.broadcast %cst_24 : f32 to vector<8x128xf32>
    %32 = arith.mulf %31, %28 : vector<8x128xf32>
    %33 = arith.select %30, %28, %32 : vector<8x128xi1>, vector<8x128xf32>
    %34 = arith.truncf %33 : vector<8x128xf32> to vector<8x128xbf16>
    %cst_25 = arith.constant dense<0.000000e+00> : vector<8x128xf32>
    %35 = tpu.matmul %5, %34, %cst_25 {dimension_numbers = #tpu.dot_dimension_numbers<[1], [0], [0], [1], [0, 0, 1, 1], [], []>} : vector<8x8xbf16>, vector<8x128xbf16>, vector<8x128xf32> -> vector<8x128xf32>
    %36 = arith.truncf %35 : vector<8x128xf32> to vector<8x128xbf16>
    %c2 = arith.constant 2 : index
    %c0_26 = arith.constant 0 : index
    %c0_27 = arith.constant 0 : index
    %37 = vector.load %arg3[%c2, %c0_26, %c0_27] : memref<12x128x128xbf16, #tpu.memory_space<vmem>>, vector<1x128x128xbf16>
    %38 = vector.shape_cast %37 : vector<1x128x128xbf16> to vector<128x128xbf16>
    %cst_28 = arith.constant dense<0.000000e+00> : vector<8x128xf32>
    %39 = tpu.matmul %36, %38, %cst_28 {dimension_numbers = #tpu.dot_dimension_numbers<[1], [0], [0], [1], [0, 0, 1, 1], [], []>} : vector<8x128xbf16>, vector<128x128xbf16>, vector<8x128xf32> -> vector<8x128xf32>
    %c2_29 = arith.constant 2 : index
    %c0_30 = arith.constant 0 : index
    %40 = vector.load %arg4[%c2_29, %c0_30] : memref<12x128xbf16, #tpu.memory_space<vmem>>, vector<1x128xbf16>
    %41 = arith.extf %40 : vector<1x128xbf16> to vector<1x128xf32>
    %42 = vector.broadcast %41 : vector<1x128xf32> to vector<8x128xf32>
    %43 = arith.addf %39, %42 : vector<8x128xf32>
    %cst_31 = arith.constant 0.000000e+00 : f32
    %44 = vector.broadcast %cst_31 : f32 to vector<8x128xf32>
    %45 = arith.cmpf oge, %43, %44 : vector<8x128xf32>
    %cst_32 = arith.constant 0.00999999977 : f32
    %46 = vector.broadcast %cst_32 : f32 to vector<8x128xf32>
    %47 = arith.mulf %46, %43 : vector<8x128xf32>
    %48 = arith.select %45, %43, %47 : vector<8x128xi1>, vector<8x128xf32>
    %49 = arith.truncf %48 : vector<8x128xf32> to vector<8x128xbf16>
    %c3 = arith.constant 3 : index
    %c0_33 = arith.constant 0 : index
    %c0_34 = arith.constant 0 : index
    %50 = vector.load %arg3[%c3, %c0_33, %c0_34] : memref<12x128x128xbf16, #tpu.memory_space<vmem>>, vector<1x128x128xbf16>
    %51 = vector.shape_cast %50 : vector<1x128x128xbf16> to vector<128x128xbf16>
    %cst_35 = arith.constant dense<0.000000e+00> : vector<8x128xf32>
    %52 = tpu.matmul %49, %51, %cst_35 {dimension_numbers = #tpu.dot_dimension_numbers<[1], [0], [0], [1], [0, 0, 1, 1], [], []>} : vector<8x128xbf16>, vector<128x128xbf16>, vector<8x128xf32> -> vector<8x128xf32>
    %c3_36 = arith.constant 3 : index
    %c0_37 = arith.constant 0 : index
    %53 = vector.load %arg4[%c3_36, %c0_37] : memref<12x128xbf16, #tpu.memory_space<vmem>>, vector<1x128xbf16>
    %54 = arith.extf %53 : vector<1x128xbf16> to vector<1x128xf32>
    %55 = vector.broadcast %54 : vector<1x128xf32> to vector<8x128xf32>
    %56 = arith.addf %52, %55 : vector<8x128xf32>
    %cst_38 = arith.constant 0.000000e+00 : f32
    %57 = vector.broadcast %cst_38 : f32 to vector<8x128xf32>
    %58 = arith.cmpf oge, %56, %57 : vector<8x128xf32>
    %cst_39 = arith.constant 0.00999999977 : f32
    %59 = vector.broadcast %cst_39 : f32 to vector<8x128xf32>
    %60 = arith.mulf %59, %56 : vector<8x128xf32>
    %61 = arith.select %58, %56, %60 : vector<8x128xi1>, vector<8x128xf32>
    %62 = arith.truncf %61 : vector<8x128xf32> to vector<8x128xbf16>
    %cst_40 = arith.constant dense<0.000000e+00> : vector<8x128xf32>
    %63 = tpu.matmul %7, %62, %cst_40 {dimension_numbers = #tpu.dot_dimension_numbers<[1], [0], [0], [1], [0, 0, 1, 1], [], []>} : vector<8x8xbf16>, vector<8x128xbf16>, vector<8x128xf32> -> vector<8x128xf32>
    %64 = arith.addf %33, %63 : vector<8x128xf32>
    %65 = arith.truncf %64 : vector<8x128xf32> to vector<8x128xbf16>
    %c4 = arith.constant 4 : index
    %c0_41 = arith.constant 0 : index
    %c0_42 = arith.constant 0 : index
    %66 = vector.load %arg3[%c4, %c0_41, %c0_42] : memref<12x128x128xbf16, #tpu.memory_space<vmem>>, vector<1x128x128xbf16>
    %67 = vector.shape_cast %66 : vector<1x128x128xbf16> to vector<128x128xbf16>
    %cst_43 = arith.constant dense<0.000000e+00> : vector<8x128xf32>
    %68 = tpu.matmul %65, %67, %cst_43 {dimension_numbers = #tpu.dot_dimension_numbers<[1], [0], [0], [1], [0, 0, 1, 1], [], []>} : vector<8x128xbf16>, vector<128x128xbf16>, vector<8x128xf32> -> vector<8x128xf32>
    %c4_44 = arith.constant 4 : index
    %c0_45 = arith.constant 0 : index
    %69 = vector.load %arg4[%c4_44, %c0_45] : memref<12x128xbf16, #tpu.memory_space<vmem>>, vector<1x128xbf16>
    %70 = arith.extf %69 : vector<1x128xbf16> to vector<1x128xf32>
    %71 = vector.broadcast %70 : vector<1x128xf32> to vector<8x128xf32>
    %72 = arith.addf %68, %71 : vector<8x128xf32>
    %cst_46 = arith.constant 0.000000e+00 : f32
    %73 = vector.broadcast %cst_46 : f32 to vector<8x128xf32>
    %74 = arith.cmpf oge, %72, %73 : vector<8x128xf32>
    %cst_47 = arith.constant 0.00999999977 : f32
    %75 = vector.broadcast %cst_47 : f32 to vector<8x128xf32>
    %76 = arith.mulf %75, %72 : vector<8x128xf32>
    %77 = arith.select %74, %72, %76 : vector<8x128xi1>, vector<8x128xf32>
    %78 = arith.addf %77, %3 : vector<8x128xf32>
    %79 = arith.truncf %78 : vector<8x128xf32> to vector<8x128xbf16>
    %c5 = arith.constant 5 : index
    %c0_48 = arith.constant 0 : index
    %c0_49 = arith.constant 0 : index
    %80 = vector.load %arg3[%c5, %c0_48, %c0_49] : memref<12x128x128xbf16, #tpu.memory_space<vmem>>, vector<1x128x128xbf16>
    %81 = vector.shape_cast %80 : vector<1x128x128xbf16> to vector<128x128xbf16>
    %cst_50 = arith.constant dense<0.000000e+00> : vector<8x128xf32>
    %82 = tpu.matmul %79, %81, %cst_50 {dimension_numbers = #tpu.dot_dimension_numbers<[1], [0], [0], [1], [0, 0, 1, 1], [], []>} : vector<8x128xbf16>, vector<128x128xbf16>, vector<8x128xf32> -> vector<8x128xf32>
    %c5_51 = arith.constant 5 : index
    %c0_52 = arith.constant 0 : index
    %83 = vector.load %arg4[%c5_51, %c0_52] : memref<12x128xbf16, #tpu.memory_space<vmem>>, vector<1x128xbf16>
    %84 = arith.extf %83 : vector<1x128xbf16> to vector<1x128xf32>
    %85 = vector.broadcast %84 : vector<1x128xf32> to vector<8x128xf32>
    %86 = arith.addf %82, %85 : vector<8x128xf32>
    %cst_53 = arith.constant 0.000000e+00 : f32
    %87 = vector.broadcast %cst_53 : f32 to vector<8x128xf32>
    %88 = arith.cmpf oge, %86, %87 : vector<8x128xf32>
    %cst_54 = arith.constant 0.00999999977 : f32
    %89 = vector.broadcast %cst_54 : f32 to vector<8x128xf32>
    %90 = arith.mulf %89, %86 : vector<8x128xf32>
    %91 = arith.select %88, %86, %90 : vector<8x128xi1>, vector<8x128xf32>
    %92 = arith.truncf %91 : vector<8x128xf32> to vector<8x128xbf16>
    %c6 = arith.constant 6 : index
    %c0_55 = arith.constant 0 : index
    %c0_56 = arith.constant 0 : index
    %93 = vector.load %arg3[%c6, %c0_55, %c0_56] : memref<12x128x128xbf16, #tpu.memory_space<vmem>>, vector<1x128x128xbf16>
    %94 = vector.shape_cast %93 : vector<1x128x128xbf16> to vector<128x128xbf16>
    %cst_57 = arith.constant dense<0.000000e+00> : vector<8x128xf32>
    %95 = tpu.matmul %92, %94, %cst_57 {dimension_numbers = #tpu.dot_dimension_numbers<[1], [0], [0], [1], [0, 0, 1, 1], [], []>} : vector<8x128xbf16>, vector<128x128xbf16>, vector<8x128xf32> -> vector<8x128xf32>
    %c6_58 = arith.constant 6 : index
    %c0_59 = arith.constant 0 : index
    %96 = vector.load %arg4[%c6_58, %c0_59] : memref<12x128xbf16, #tpu.memory_space<vmem>>, vector<1x128xbf16>
    %97 = arith.extf %96 : vector<1x128xbf16> to vector<1x128xf32>
    %98 = vector.broadcast %97 : vector<1x128xf32> to vector<8x128xf32>
    %99 = arith.addf %95, %98 : vector<8x128xf32>
    %cst_60 = arith.constant 0.000000e+00 : f32
    %100 = vector.broadcast %cst_60 : f32 to vector<8x128xf32>
    %101 = arith.cmpf oge, %99, %100 : vector<8x128xf32>
    %cst_61 = arith.constant 0.00999999977 : f32
    %102 = vector.broadcast %cst_61 : f32 to vector<8x128xf32>
    %103 = arith.mulf %102, %99 : vector<8x128xf32>
    %104 = arith.select %101, %99, %103 : vector<8x128xi1>, vector<8x128xf32>
    %105 = arith.truncf %104 : vector<8x128xf32> to vector<8x128xbf16>
    %cst_62 = arith.constant dense<0.000000e+00> : vector<8x128xf32>
    %106 = tpu.matmul %5, %105, %cst_62 {dimension_numbers = #tpu.dot_dimension_numbers<[1], [0], [0], [1], [0, 0, 1, 1], [], []>} : vector<8x8xbf16>, vector<8x128xbf16>, vector<8x128xf32> -> vector<8x128xf32>
    %107 = arith.truncf %106 : vector<8x128xf32> to vector<8x128xbf16>
    %c7 = arith.constant 7 : index
    %c0_63 = arith.constant 0 : index
    %c0_64 = arith.constant 0 : index
    %108 = vector.load %arg3[%c7, %c0_63, %c0_64] : memref<12x128x128xbf16, #tpu.memory_space<vmem>>, vector<1x128x128xbf16>
    %109 = vector.shape_cast %108 : vector<1x128x128xbf16> to vector<128x128xbf16>
    %cst_65 = arith.constant dense<0.000000e+00> : vector<8x128xf32>
    %110 = tpu.matmul %107, %109, %cst_65 {dimension_numbers = #tpu.dot_dimension_numbers<[1], [0], [0], [1], [0, 0, 1, 1], [], []>} : vector<8x128xbf16>, vector<128x128xbf16>, vector<8x128xf32> -> vector<8x128xf32>
    %c7_66 = arith.constant 7 : index
    %c0_67 = arith.constant 0 : index
    %111 = vector.load %arg4[%c7_66, %c0_67] : memref<12x128xbf16, #tpu.memory_space<vmem>>, vector<1x128xbf16>
    %112 = arith.extf %111 : vector<1x128xbf16> to vector<1x128xf32>
    %113 = vector.broadcast %112 : vector<1x128xf32> to vector<8x128xf32>
    %114 = arith.addf %110, %113 : vector<8x128xf32>
    %cst_68 = arith.constant 0.000000e+00 : f32
    %115 = vector.broadcast %cst_68 : f32 to vector<8x128xf32>
    %116 = arith.cmpf oge, %114, %115 : vector<8x128xf32>
    %cst_69 = arith.constant 0.00999999977 : f32
    %117 = vector.broadcast %cst_69 : f32 to vector<8x128xf32>
    %118 = arith.mulf %117, %114 : vector<8x128xf32>
    %119 = arith.select %116, %114, %118 : vector<8x128xi1>, vector<8x128xf32>
    %120 = arith.truncf %119 : vector<8x128xf32> to vector<8x128xbf16>
    %c8 = arith.constant 8 : index
    %c0_70 = arith.constant 0 : index
    %c0_71 = arith.constant 0 : index
    %121 = vector.load %arg3[%c8, %c0_70, %c0_71] : memref<12x128x128xbf16, #tpu.memory_space<vmem>>, vector<1x128x128xbf16>
    %122 = vector.shape_cast %121 : vector<1x128x128xbf16> to vector<128x128xbf16>
    %cst_72 = arith.constant dense<0.000000e+00> : vector<8x128xf32>
    %123 = tpu.matmul %120, %122, %cst_72 {dimension_numbers = #tpu.dot_dimension_numbers<[1], [0], [0], [1], [0, 0, 1, 1], [], []>} : vector<8x128xbf16>, vector<128x128xbf16>, vector<8x128xf32> -> vector<8x128xf32>
    %c8_73 = arith.constant 8 : index
    %c0_74 = arith.constant 0 : index
    %124 = vector.load %arg4[%c8_73, %c0_74] : memref<12x128xbf16, #tpu.memory_space<vmem>>, vector<1x128xbf16>
    %125 = arith.extf %124 : vector<1x128xbf16> to vector<1x128xf32>
    %126 = vector.broadcast %125 : vector<1x128xf32> to vector<8x128xf32>
    %127 = arith.addf %123, %126 : vector<8x128xf32>
    %cst_75 = arith.constant 0.000000e+00 : f32
    %128 = vector.broadcast %cst_75 : f32 to vector<8x128xf32>
    %129 = arith.cmpf oge, %127, %128 : vector<8x128xf32>
    %cst_76 = arith.constant 0.00999999977 : f32
    %130 = vector.broadcast %cst_76 : f32 to vector<8x128xf32>
    %131 = arith.mulf %130, %127 : vector<8x128xf32>
    %132 = arith.select %129, %127, %131 : vector<8x128xi1>, vector<8x128xf32>
    %133 = arith.truncf %132 : vector<8x128xf32> to vector<8x128xbf16>
    %cst_77 = arith.constant dense<0.000000e+00> : vector<8x128xf32>
    %134 = tpu.matmul %7, %133, %cst_77 {dimension_numbers = #tpu.dot_dimension_numbers<[1], [0], [0], [1], [0, 0, 1, 1], [], []>} : vector<8x8xbf16>, vector<8x128xbf16>, vector<8x128xf32> -> vector<8x128xf32>
    %135 = arith.addf %104, %134 : vector<8x128xf32>
    %136 = arith.truncf %135 : vector<8x128xf32> to vector<8x128xbf16>
    %c9 = arith.constant 9 : index
    %c0_78 = arith.constant 0 : index
    %c0_79 = arith.constant 0 : index
    %137 = vector.load %arg3[%c9, %c0_78, %c0_79] : memref<12x128x128xbf16, #tpu.memory_space<vmem>>, vector<1x128x128xbf16>
    %138 = vector.shape_cast %137 : vector<1x128x128xbf16> to vector<128x128xbf16>
    %cst_80 = arith.constant dense<0.000000e+00> : vector<8x128xf32>
    %139 = tpu.matmul %136, %138, %cst_80 {dimension_numbers = #tpu.dot_dimension_numbers<[1], [0], [0], [1], [0, 0, 1, 1], [], []>} : vector<8x128xbf16>, vector<128x128xbf16>, vector<8x128xf32> -> vector<8x128xf32>
    %c9_81 = arith.constant 9 : index
    %c0_82 = arith.constant 0 : index
    %140 = vector.load %arg4[%c9_81, %c0_82] : memref<12x128xbf16, #tpu.memory_space<vmem>>, vector<1x128xbf16>
    %141 = arith.extf %140 : vector<1x128xbf16> to vector<1x128xf32>
    %142 = vector.broadcast %141 : vector<1x128xf32> to vector<8x128xf32>
    %143 = arith.addf %139, %142 : vector<8x128xf32>
    %cst_83 = arith.constant 0.000000e+00 : f32
    %144 = vector.broadcast %cst_83 : f32 to vector<8x128xf32>
    %145 = arith.cmpf oge, %143, %144 : vector<8x128xf32>
    %cst_84 = arith.constant 0.00999999977 : f32
    %146 = vector.broadcast %cst_84 : f32 to vector<8x128xf32>
    %147 = arith.mulf %146, %143 : vector<8x128xf32>
    %148 = arith.select %145, %143, %147 : vector<8x128xi1>, vector<8x128xf32>
    %149 = arith.addf %148, %78 : vector<8x128xf32>
    %150 = arith.truncf %149 : vector<8x128xf32> to vector<8x128xbf16>
    %cst_85 = arith.constant dense<0.000000e+00> : vector<8x128xf32>
    %151 = tpu.matmul %5, %150, %cst_85 {dimension_numbers = #tpu.dot_dimension_numbers<[1], [0], [0], [1], [0, 0, 1, 1], [], []>} : vector<8x8xbf16>, vector<8x128xbf16>, vector<8x128xf32> -> vector<8x128xf32>
    %152 = arith.truncf %151 : vector<8x128xf32> to vector<8x128xbf16>
    %c10 = arith.constant 10 : index
    %c0_86 = arith.constant 0 : index
    %c0_87 = arith.constant 0 : index
    %153 = vector.load %arg3[%c10, %c0_86, %c0_87] : memref<12x128x128xbf16, #tpu.memory_space<vmem>>, vector<1x128x128xbf16>
    %154 = vector.shape_cast %153 : vector<1x128x128xbf16> to vector<128x128xbf16>
    %cst_88 = arith.constant dense<0.000000e+00> : vector<8x128xf32>
    %155 = tpu.matmul %152, %154, %cst_88 {dimension_numbers = #tpu.dot_dimension_numbers<[1], [0], [0], [1], [0, 0, 1, 1], [], []>} : vector<8x128xbf16>, vector<128x128xbf16>, vector<8x128xf32> -> vector<8x128xf32>
    %c10_89 = arith.constant 10 : index
    %c0_90 = arith.constant 0 : index
    %156 = vector.load %arg4[%c10_89, %c0_90] : memref<12x128xbf16, #tpu.memory_space<vmem>>, vector<1x128xbf16>
    %157 = arith.extf %156 : vector<1x128xbf16> to vector<1x128xf32>
    %158 = vector.broadcast %157 : vector<1x128xf32> to vector<8x128xf32>
    %159 = arith.addf %155, %158 : vector<8x128xf32>
    %cst_91 = arith.constant 0.000000e+00 : f32
    %160 = vector.broadcast %cst_91 : f32 to vector<8x128xf32>
    %161 = arith.cmpf oge, %159, %160 : vector<8x128xf32>
    %cst_92 = arith.constant 0.00999999977 : f32
    %162 = vector.broadcast %cst_92 : f32 to vector<8x128xf32>
    %163 = arith.mulf %162, %159 : vector<8x128xf32>
    %164 = arith.select %161, %159, %163 : vector<8x128xi1>, vector<8x128xf32>
    %165 = arith.truncf %164 : vector<8x128xf32> to vector<8x128xbf16>
    %c11 = arith.constant 11 : index
    %c0_93 = arith.constant 0 : index
    %c0_94 = arith.constant 0 : index
    %166 = vector.load %arg3[%c11, %c0_93, %c0_94] : memref<12x128x128xbf16, #tpu.memory_space<vmem>>, vector<1x128x128xbf16>
    %167 = vector.shape_cast %166 : vector<1x128x128xbf16> to vector<128x128xbf16>
    %cst_95 = arith.constant dense<0.000000e+00> : vector<8x128xf32>
    %168 = tpu.matmul %165, %167, %cst_95 {dimension_numbers = #tpu.dot_dimension_numbers<[1], [0], [0], [1], [0, 0, 1, 1], [], []>} : vector<8x128xbf16>, vector<128x128xbf16>, vector<8x128xf32> -> vector<8x128xf32>
    %c11_96 = arith.constant 11 : index
    %c0_97 = arith.constant 0 : index
    %169 = vector.load %arg4[%c11_96, %c0_97] : memref<12x128xbf16, #tpu.memory_space<vmem>>, vector<1x128xbf16>
    %170 = arith.extf %169 : vector<1x128xbf16> to vector<1x128xf32>
    %171 = vector.broadcast %170 : vector<1x128xf32> to vector<8x128xf32>
    %172 = arith.addf %168, %171 : vector<8x128xf32>
    %cst_98 = arith.constant 0.000000e+00 : f32
    %173 = vector.broadcast %cst_98 : f32 to vector<8x128xf32>
    %174 = arith.cmpf oge, %172, %173 : vector<8x128xf32>
    %cst_99 = arith.constant 0.00999999977 : f32
    %175 = vector.broadcast %cst_99 : f32 to vector<8x128xf32>
    %176 = arith.mulf %175, %172 : vector<8x128xf32>
    %177 = arith.select %174, %172, %176 : vector<8x128xi1>, vector<8x128xf32>
    %c0_100 = arith.constant 0 : index
    %178 = memref.load %arg8[%c0_100] : memref<1xf32, #tpu.memory_space<smem>>
    %c0_101 = arith.constant 0 : index
    %c0_102 = arith.constant 0 : index
    %c0_103 = arith.constant 0 : index
    %179 = vector.load %arg7[%c0_101, %c0_102, %c0_103] : memref<1x8x128xf32, #tpu.memory_space<vmem>>, vector<1x8x128xf32>
    %180 = vector.shape_cast %179 : vector<1x8x128xf32> to vector<8x128xf32>
    %181 = vector.broadcast %178 : f32 to vector<8x128xf32>
    %182 = arith.mulf %181, %180 : vector<8x128xf32>
    %183 = arith.addf %177, %182 : vector<8x128xf32>
    %c0_104 = arith.constant 0 : index
    %c0_105 = arith.constant 0 : index
    %c0_106 = arith.constant 0 : index
    %184 = vector.load %arg9[%c0_104, %c0_105, %c0_106] : memref<1x8x128xf32, #tpu.memory_space<vmem>>, vector<1x8x128xf32>
    %185 = vector.shape_cast %184 : vector<1x8x128xf32> to vector<8x128xf32>
    %186 = vector.shape_cast %183 : vector<8x128xf32> to vector<1x8x128xf32>
    tpu.vector_store %arg9[%c0_104, %c0_105, %c0_106], %186 {strides = array<i32>} : memref<1x8x128xf32, #tpu.memory_space<vmem>>, vector<1x8x128xf32>,
    return
  }
  func.func @transform_0(%arg0: i32) -> (i32, i32, i32) {
    %c0_i32 = arith.constant 0 : i32
    %c0_i32_0 = arith.constant 0 : i32
    %c0_i32_1 = arith.constant 0 : i32
    return %arg0, %c0_i32, %c0_i32_0 : i32, i32, i32
  }
  func.func @transform_1(%arg0: i32) -> (i32, i32) {
    %c0_i32 = arith.constant 0 : i32
    %c0_i32_0 = arith.constant 0 : i32
    %c0_i32_1 = arith.constant 0 : i32
    return %c0_i32, %c0_i32_0 : i32, i32
  }
  func.func @transform_2(%arg0: i32) -> (i32, i32, i32) {
    %c0_i32 = arith.constant 0 : i32
    %c0_i32_0 = arith.constant 0 : i32
    %c0_i32_1 = arith.constant 0 : i32
    %c0_i32_2 = arith.constant 0 : i32
    return %c0_i32, %c0_i32_0, %c0_i32_1 : i32, i32, i32
  }
  func.func @transform_3(%arg0: i32) -> (i32, i32) {
    %c0_i32 = arith.constant 0 : i32
    %c0_i32_0 = arith.constant 0 : i32
    %c0_i32_1 = arith.constant 0 : i32
    return %c0_i32, %c0_i32_0 : i32, i32
  }
  func.func @transform_4(%arg0: i32) -> (i32, i32, i32) {
    %c0_i32 = arith.constant 0 : i32
    %c0_i32_0 = arith.constant 0 : i32
    %c0_i32_1 = arith.constant 0 : i32
    return %arg0, %c0_i32, %c0_i32_0 : i32, i32, i32
  }
  func.func @transform_5(%arg0: i32) -> (i32, i32, i32) {
    %c0_i32 = arith.constant 0 : i32
    %c0_i32_0 = arith.constant 0 : i32
    %c0_i32_1 = arith.constant 0 : i32
    return %arg0, %c0_i32, %c0_i32_0 : i32, i32, i32
  }
  func.func @transform_6(%arg0: i32) -> (i32, i32, i32) {
    %c0_i32 = arith.constant 0 : i32
    %c0_i32_0 = arith.constant 0 : i32
    %c0_i32_1 = arith.constant 0 : i32
    return %arg0, %c0_i32, %c0_i32_0 : i32, i32, i32
  }
  func.func @transform_7(%arg0: i32) -> i32 {
    %c0_i32 = arith.constant 0 : i32
    %c0_i32_0 = arith.constant 0 : i32
    return %c0_i32 : i32
  }
  func.func @transform_8(%arg0: i32) -> (i32, i32, i32) {
    %c0_i32 = arith.constant 0 : i32
    %c0_i32_0 = arith.constant 0 : i32
    %c0_i32_1 = arith.constant 0 : i32
    return %arg0, %c0_i32, %c0_i32_0 : i32, i32, i32
  }
}

</mosaic_0001>

<llo_original>
// kernel: pointnet_forward.1
$region0: #{pointnet_forward.1}
  #allocation0 [shape = 'u32[]', space=smem, size = 0x4, offset = 0x4, fixed_abs, tag = 'smem constant byte address 0x4 - core index']
  #allocation1 [shape = 'u32[144,128]{1,0:T(1,128)}', space=vmem, size = 0x12000, scoped, tag = 'internal scratch']
  #allocation2 [shape = 'f32[1]{0:T(128)S(6)}', space=smem, size = 0x200, scoped, tag = 'scoped memory for pointnet_forward.1']
  %s0 = inlined_call_operand.hbm [shape: bf16[4,8,160], index: 0, kind: input, shape index: {}]
  %s1 = inlined_call_operand.hbm [shape: bf16[160,128], index: 1, kind: input, shape index: {}]
  %s2 = inlined_call_operand.hbm [shape: bf16[12,128,128], index: 2, kind: input, shape index: {}]
  %s3 = inlined_call_operand.hbm [shape: bf16[12,128], index: 3, kind: input, shape index: {}]
  %s4 = inlined_call_operand.hbm [shape: bf16[4,8,8], index: 4, kind: input, shape index: {}]
  %s5 = inlined_call_operand.hbm [shape: bf16[4,8,8], index: 5, kind: input, shape index: {}]
  %s6 = inlined_call_operand.hbm [shape: f32[4,8,128], index: 6, kind: input, shape index: {}]
  %s7 = inlined_call_operand.<no memory space> [shape: f32[1], index: 7, kind: input, shape index: {}]
  %s8 = inlined_call_operand.hbm [shape: f32[4,8,128], index: 8, kind: output, shape index: {}]
  %s9 = sld [smem:[#allocation0]]
  $region93: #{pointnet_forward.1} parent=0
    _
  %s11 = ssub.s32 1, %s9
  %s12 = scalar_select 0, %s11, %s9
  %13 = sst [smem:[#allocation2]] %s7
  $region1: #{pointnet_forward.1} parent=0
    #allocation3 [shape = 'u8[8192]{0}', space=vmem, size = 0x2000, scoped, tag = 'input window, operand 0']
    #allocation4 [shape = 's32[2]{0}', space=sflag, size = 0x8, scoped, tag = 'scoped memory for pointnet_forward.1']
    #allocation5 [shape = 's32[2]{0}', space=sflag, size = 0x8, scoped, tag = 'scoped memory for pointnet_forward.1']
    #allocation6 [shape = 'u8[40960]{0}', space=vmem, size = 0xa000, scoped, tag = 'input window, operand 1, single buffered']
    #allocation7 [shape = 's32[1]{0}', space=sflag, size = 0x4, scoped, tag = 'scoped memory for pointnet_forward.1']
    #allocation8 [shape = 'u8[393216]{0}', space=vmem, size = 0x60000, scoped, tag = 'input window, operand 2, single buffered']
    #allocation9 [shape = 'u8[4096]{0}', space=vmem, size = 0x1000, scoped, tag = 'input window, operand 3, single buffered']
    #allocation10 [shape = 's32[1]{0}', space=sflag, size = 0x4, scoped, tag = 'scoped memory for pointnet_forward.1']
    #allocation11 [shape = 'u8[4096]{0}', space=vmem, size = 0x1000, scoped, tag = 'input window, operand 4']
    #allocation12 [shape = 'u8[4096]{0}', space=vmem, size = 0x1000, scoped, tag = 'input window, operand 5']
    #allocation13 [shape = 'u8[8192]{0}', space=vmem, size = 0x2000, scoped, tag = 'input window, operand 6']
    #allocation14 [shape = 'u8[8192]{0}', space=vmem, size = 0x2000, scoped, tag = 'output window, operand 0']
    %14 = vsyncpa [#allocation4], 0
    %s15 = scalar_lea.sflag [#allocation4], 1
    %16 = vsyncpa %s15, 0
    %17 = vsyncpa [#allocation7], 0
    %18 = vsyncpa [#allocation10], 0
    %19 = vsyncpa [#allocation5], 0
    %s20 = scalar_lea.sflag [#allocation5], 1
    %21 = vsyncpa %s20, 0
    loop: start=0, step=1, limit=6
    $region2: #{pointnet_forward.1} parent=1 // loop_pre_header
      _
    $region3: #{pointnet_forward.1} parent=1 // loop_header
      %s23 = sphi 0, %s27
      %p24 = scmp.ge.s32.totalorder %s23, 6
      %s33 = sphi 0, %s35
      %s36 = sphi 0, %s33
      %s37 = sphi 0, %s36
      %s53 = sphi 0, %s37
      %s57 = sphi 0, %s57
      %s59 = sphi 0, %s57
      %s60 = sphi 0, %s59
      %s74 = sphi 0, %s60
      %s78 = sphi 0, %s78
      %s80 = sphi 0, %s78
      %s81 = sphi 0, %s80
      %s95 = sphi 0, %s81
      %s99 = sphi 0, %s99
      %s101 = sphi 0, %s99
      %s102 = sphi 0, %s101
      %s116 = sphi 0, %s102
      %s122 = sphi 0, %s124
      %s125 = sphi 0, %s122
      %s126 = sphi 0, %s125
      %s142 = sphi 0, %s126
      %s148 = sphi 0, %s150
      %s151 = sphi 0, %s148
      %s152 = sphi 0, %s151
      %s168 = sphi 0, %s152
      %s174 = sphi 0, %s176
      %s177 = sphi 0, %s174
      %s178 = sphi 0, %s177
      %s194 = sphi 0, %s178
      %s198 = sphi 0, %s198
      %s200 = sphi 0, %s198
      %s201 = sphi 0, %s200
      %s215 = sphi 0, %s201
      %s221 = sphi 0, %s223
      %s224 = sphi 0, %s221
      %s225 = sphi 0, %s224
      %s241 = sphi 0, %s225
    $region4: #{pointnet_forward.1} parent=1 // loop_header_branch
      %26 = sbr.rel (%p24) target = $region8
    $region5: #{pointnet_forward.1} parent=1 // loop_body
      %s28 = ssub.s32 %s23, 1
      %s29 = ssub.s32 %s23, 2
      %s30 = sadd.s32 %s23, 1
      %s31 = ssub.s32 %s23, %s30
      %p32 = scmp.eq.s32.totalorder %s31, 0
      %s34 = sadd.s32 %s33, 1
      %s35 = scalar_select %p32, %s33, %s34
      %p38 = pneg %p32
      %p39 = scmp.eq.s32.totalorder %s23, 3
      %p40 = por %p38, %p39
      %p41 = scmp.ne.s32.totalorder %s33, %s36
      %p42 = scmp.eq.s32.totalorder %s23, 0
      %p43 = por %p41, %p42
      %p44 = scmp.ne.s32.totalorder %s33, %s36
      %p45 = scmp.eq.s32.totalorder %s28, 3
      %p46 = por %p44, %p45
      %p47 = scmp.ne.s32.totalorder %s36, %s37
      %p48 = scmp.eq.s32.totalorder %s28, 0
      %p49 = por %p47, %p48
      %p50 = scmp.ne.s32.totalorder %s36, %s37
      %p51 = scmp.eq.s32.totalorder %s29, 3
      %p52 = por %p50, %p51
      %p54 = scmp.ne.s32.totalorder %s37, %s53
      %p55 = scmp.eq.s32.totalorder %s29, 0
      %p56 = por %p54, %p55
      %s58 = sadd.s32 %s57, 1
      %p61 = scmp.eq.s32.totalorder %s23, 3
      %p62 = scmp.ne.s32.totalorder %s57, %s59
      %p63 = scmp.eq.s32.totalorder %s23, 0
      %p64 = por %p62, %p63
      %p65 = scmp.ne.s32.totalorder %s57, %s59
      %p66 = scmp.eq.s32.totalorder %s28, 3
      %p67 = por %p65, %p66
      %p68 = scmp.ne.s32.totalorder %s59, %s60
      %p69 = scmp.eq.s32.totalorder %s28, 0
      %p70 = por %p68, %p69
      %p71 = scmp.ne.s32.totalorder %s59, %s60
      %p72 = scmp.eq.s32.totalorder %s29, 3
      %p73 = por %p71, %p72
      %p75 = scmp.ne.s32.totalorder %s60, %s74
      %p76 = scmp.eq.s32.totalorder %s29, 0
      %p77 = por %p75, %p76
      %s79 = sadd.s32 %s78, 1
      %p82 = scmp.eq.s32.totalorder %s23, 3
      %p83 = scmp.ne.s32.totalorder %s78, %s80
      %p84 = scmp.eq.s32.totalorder %s23, 0
      %p85 = por %p83, %p84
      %p86 = scmp.ne.s32.totalorder %s78, %s80
      %p87 = scmp.eq.s32.totalorder %s28, 3
      %p88 = por %p86, %p87
      %p89 = scmp.ne.s32.totalorder %s80, %s81
      %p90 = scmp.eq.s32.totalorder %s28, 0
      %p91 = por %p89, %p90
      %p92 = scmp.ne.s32.totalorder %s80, %s81
      %p93 = scmp.eq.s32.totalorder %s29, 3
      %p94 = por %p92, %p93
      %p96 = scmp.ne.s32.totalorder %s81, %s95
      %p97 = scmp.eq.s32.totalorder %s29, 0
      %p98 = por %p96, %p97
      %s100 = sadd.s32 %s99, 1
      %p103 = scmp.eq.s32.totalorder %s23, 3
      %p104 = scmp.ne.s32.totalorder %s99, %s101
      %p105 = scmp.eq.s32.totalorder %s23, 0
      %p106 = por %p104, %p105
      %p107 = scmp.ne.s32.totalorder %s99, %s101
      %p108 = scmp.eq.s32.totalorder %s28, 3
      %p109 = por %p107, %p108
      %p110 = scmp.ne.s32.totalorder %s101, %s102
      %p111 = scmp.eq.s32.totalorder %s28, 0
      %p112 = por %p110, %p111
      %p113 = scmp.ne.s32.totalorder %s101, %s102
      %p114 = scmp.eq.s32.totalorder %s29, 3
      %p115 = por %p113, %p114
      %p117 = scmp.ne.s32.totalorder %s102, %s116
      %p118 = scmp.eq.s32.totalorder %s29, 0
      %p119 = por %p117, %p118
      %s120 = ssub.s32 %s23, %s30
      %p121 = scmp.eq.s32.totalorder %s120, 0
      %s123 = sadd.s32 %s122, 1
      %s124 = scalar_select %p121, %s122, %s123
      %p127 = pneg %p121
      %p128 = scmp.eq.s32.totalorder %s23, 3
      %p129 = por %p127, %p128
      %p130 = scmp.ne.s32.totalorder %s122, %s125
      %p131 = scmp.eq.s32.totalorder %s23, 0
      %p132 = por %p130, %p131
      %p133 = scmp.ne.s32.totalorder %s122, %s125
      %p134 = scmp.eq.s32.totalorder %s28, 3
      %p135 = por %p133, %p134
      %p136 = scmp.ne.s32.totalorder %s125, %s126
      %p137 = scmp.eq.s32.totalorder %s28, 0
      %p138 = por %p136, %p137
      %p139 = scmp.ne.s32.totalorder %s125, %s126
      %p140 = scmp.eq.s32.totalorder %s29, 3
      %p141 = por %p139, %p140
      %p143 = scmp.ne.s32.totalorder %s126, %s142
      %p144 = scmp.eq.s32.totalorder %s29, 0
      %p145 = por %p143, %p144
      %s146 = ssub.s32 %s23, %s30
      %p147 = scmp.eq.s32.totalorder %s146, 0
      %s149 = sadd.s32 %s148, 1
      %s150 = scalar_select %p147, %s148, %s149
      %p153 = pneg %p147
      %p154 = scmp.eq.s32.totalorder %s23, 3
      %p155 = por %p153, %p154
      %p156 = scmp.ne.s32.totalorder %s148, %s151
      %p157 = scmp.eq.s32.totalorder %s23, 0
      %p158 = por %p156, %p157
      %p159 = scmp.ne.s32.totalorder %s148, %s151
      %p160 = scmp.eq.s32.totalorder %s28, 3
      %p161 = por %p159, %p160
      %p162 = scmp.ne.s32.totalorder %s151, %s152
      %p163 = scmp.eq.s32.totalorder %s28, 0
      %p164 = por %p162, %p163
      %p165 = scmp.ne.s32.totalorder %s151, %s152
      %p166 = scmp.eq.s32.totalorder %s29, 3
      %p167 = por %p165, %p166
      %p169 = scmp.ne.s32.totalorder %s152, %s168
      %p170 = scmp.eq.s32.totalorder %s29, 0
      %p171 = por %p169, %p170
      %s172 = ssub.s32 %s23, %s30
      %p173 = scmp.eq.s32.totalorder %s172, 0
      %s175 = sadd.s32 %s174, 1
      %s176 = scalar_select %p173, %s174, %s175
      %p179 = pneg %p173
      %p180 = scmp.eq.s32.totalorder %s23, 3
      %p181 = por %p179, %p180
      %p182 = scmp.ne.s32.totalorder %s174, %s177
      %p183 = scmp.eq.s32.totalorder %s23, 0
      %p184 = por %p182, %p183
      %p185 = scmp.ne.s32.totalorder %s174, %s177
      %p186 = scmp.eq.s32.totalorder %s28, 3
      %p187 = por %p185, %p186
      %p188 = scmp.ne.s32.totalorder %s177, %s178
      %p189 = scmp.eq.s32.totalorder %s28, 0
      %p190 = por %p188, %p189
      %p191 = scmp.ne.s32.totalorder %s177, %s178
      %p192 = scmp.eq.s32.totalorder %s29, 3
      %p193 = por %p191, %p192
      %p195 = scmp.ne.s32.totalorder %s178, %s194
      %p196 = scmp.eq.s32.totalorder %s29, 0
      %p197 = por %p195, %p196
      %s199 = sadd.s32 %s198, 1
      %p202 = scmp.eq.s32.totalorder %s23, 3
      %p203 = scmp.ne.s32.totalorder %s198, %s200
      %p204 = scmp.eq.s32.totalorder %s23, 0
      %p205 = por %p203, %p204
      %p206 = scmp.ne.s32.totalorder %s198, %s200
      %p207 = scmp.eq.s32.totalorder %s28, 3
      %p208 = por %p206, %p207
      %p209 = scmp.ne.s32.totalorder %s200, %s201
      %p210 = scmp.eq.s32.totalorder %s28, 0
      %p211 = por %p209, %p210
      %p212 = scmp.ne.s32.totalorder %s200, %s201
      %p213 = scmp.eq.s32.totalorder %s29, 3
      %p214 = por %p212, %p213
      %p216 = scmp.ne.s32.totalorder %s201, %s215
      %p217 = scmp.eq.s32.totalorder %s29, 0
      %p218 = por %p216, %p217
      %s219 = ssub.s32 %s23, %s30
      %p220 = scmp.eq.s32.totalorder %s219, 0
      %s222 = sadd.s32 %s221, 1
      %s223 = scalar_select %p220, %s221, %s222
      %p226 = pneg %p220
      %p227 = scmp.eq.s32.totalorder %s23, 3
      %p228 = por %p226, %p227
      %p229 = scmp.ne.s32.totalorder %s221, %s224
      %p230 = scmp.eq.s32.totalorder %s23, 0
      %p231 = por %p229, %p230
      %p232 = scmp.ne.s32.totalorder %s221, %s224
      %p233 = scmp.eq.s32.totalorder %s28, 3
      %p234 = por %p232, %p233
      %p235 = scmp.ne.s32.totalorder %s224, %s225
      %p236 = scmp.eq.s32.totalorder %s28, 0
      %p237 = por %p235, %p236
      %p238 = scmp.ne.s32.totalorder %s224, %s225
      %p239 = scmp.eq.s32.totalorder %s29, 3
      %p240 = por %p238, %p239
      %p242 = scmp.ne.s32.totalorder %s225, %s241
      %p243 = scmp.eq.s32.totalorder %s29, 0
      %p244 = por %p242, %p243
      %p245 = scmp.le.s32.totalorder 1, %s23
      %p246 = scmp.lt.s32.totalorder %s23, 5
      %p247 = pnand %p245, %p246
      %p248 = pneg %p247
      // Predicated region
      $region9: #{pointnet_forward.1} parent=5 // pred_check
        _
      $region10: #{pointnet_forward.1} parent=5 // pred_check_branch
        %250 = sbr.rel (%p247) target = $region12
      $region11: #{pointnet_forward.1} parent=5 // pred_region
        %s251 = ssub.s32 %s23, 1
        // Predicated region
        $region13: #{pointnet_forward.1} parent=11 // pred_check
          %p252 = pneg %p70
        $region14: #{pointnet_forward.1} parent=11 // pred_check_branch
          %254 = sbr.rel (%p252) target = $region16
        $region15: #{pointnet_forward.1} parent=11 // pred_region
          %s256 = ssub.s32 1280, 1280
          %257 = vsyncadd [#allocation7], %s256
          %s258 = sshll.u32 [#allocation6], 4
          %s259 = int_to_ptr.vmem [resolvable:$true] %s258
          %264 = dma.hbm_to_vmem [thread:$0]  %s1, 1280, %s259, [#allocation7], 64, 64, 4
        $region16: #{pointnet_forward.1} parent=11 // pred_fallthru
          _
        // Predicated region
        $region17: #{pointnet_forward.1} parent=11 // pred_check
          %p265 = pneg %p91
        $region18: #{pointnet_forward.1} parent=11 // pred_check_branch
          %267 = sbr.rel (%p265) target = $region20
        $region19: #{pointnet_forward.1} parent=11 // pred_region
          %s269 = ssub.s32 12288, 12288
          %270 = vsyncadd [#allocation7], %s269
          %s271 = sshll.u32 [#allocation8], 4
          %s272 = int_to_ptr.vmem [resolvable:$true] %s271
          %277 = dma.hbm_to_vmem [thread:$0]  %s2, 12288, %s272, [#allocation7], 64, 64, 4
        $region20: #{pointnet_forward.1} parent=11 // pred_fallthru
          _
        // Predicated region
        $region21: #{pointnet_forward.1} parent=11 // pred_check
          %p278 = pneg %p112
        $region22: #{pointnet_forward.1} parent=11 // pred_check_branch
          %280 = sbr.rel (%p278) target = $region24
        $region23: #{pointnet_forward.1} parent=11 // pred_region
          %s282 = ssub.s32 128, 128
          %283 = vsyncadd [#allocation10], %s282
          %s284 = sshll.u32 [#allocation9], 4
          %s285 = int_to_ptr.vmem [resolvable:$true] %s284
          %290 = dma.hbm_to_vmem [thread:$0]  %s3, 128, %s285, [#allocation10], 64, 64, 4
        $region24: #{pointnet_forward.1} parent=11 // pred_fallthru
          _
        // Predicated region
        $region25: #{pointnet_forward.1} parent=11 // pred_check
          %p291 = pneg %p211
        $region26: #{pointnet_forward.1} parent=11 // pred_check_branch
          %293 = sbr.rel (%p291) target = $region28
        $region27: #{pointnet_forward.1} parent=11 // pred_region
          _
        $region28: #{pointnet_forward.1} parent=11 // pred_fallthru
          _
      $region12: #{pointnet_forward.1} parent=5 // pred_fallthru
        _
      %p294 = scmp.lt.s32.totalorder %s23, 4
      // Predicated region
      $region29: #{pointnet_forward.1} parent=5 // pred_check
        %p295 = pneg %p294
      $region30: #{pointnet_forward.1} parent=5 // pred_check_branch
        %297 = sbr.rel (%p295) target = $region32
      $region31: #{pointnet_forward.1} parent=5 // pred_region
        // Predicated region
        $region33: #{pointnet_forward.1} parent=31 // pred_check
          %p298 = pneg %p43
        $region34: #{pointnet_forward.1} parent=31 // pred_check_branch
          %300 = sbr.rel (%p298) target = $region36
        $region35: #{pointnet_forward.1} parent=31 // pred_region
          %s301 = sand.u32 %s23, 1
          %s302 = scalar_lea.sflag [#allocation4], %s301
          %s303 = sand.u32 %s33, 1
          %s304 = smul.addr %s303, 8
          %s305 = scalar_lea.vmem [#allocation3], %s304
          %s307 = ssub.s32 128, 128
          %308 = vsyncadd %s302, %s307
          %s309 = smul.addr %s23, 2
          %s310 = smul.addr %s309, 64
          %s311 = scalar_lea.hbm %s0, %s310
          %s313 = sshll.u32 %s305, 4
          %s314 = int_to_ptr.vmem [resolvable:$true] %s313
          %316 = dma.hbm_to_vmem [thread:$0]  %s311, 128, %s314, %s302
        $region36: #{pointnet_forward.1} parent=31 // pred_fallthru
          _
        // Predicated region
        $region37: #{pointnet_forward.1} parent=31 // pred_check
          %p317 = pneg %p132
        $region38: #{pointnet_forward.1} parent=31 // pred_check_branch
          %319 = sbr.rel (%p317) target = $region40
        $region39: #{pointnet_forward.1} parent=31 // pred_region
          %s320 = sand.u32 %s23, 1
          %s321 = scalar_lea.sflag [#allocation4], %s320
          %s322 = sand.u32 %s122, 1
          %s323 = smul.addr %s322, 4
          %s324 = scalar_lea.vmem [#allocation11], %s323
          %s326 = ssub.s32 64, 64
          %327 = vsyncadd %s321, %s326
          %s328 = smul.addr %s23, 64
          %s329 = scalar_lea.hbm %s4, %s328
          %s331 = sshll.u32 %s324, 4
          %s332 = int_to_ptr.vmem [resolvable:$true] %s331
          %334 = dma.hbm_to_vmem [thread:$0]  %s329, 64, %s332, %s321
        $region40: #{pointnet_forward.1} parent=31 // pred_fallthru
          _
        // Predicated region
        $region41: #{pointnet_forward.1} parent=31 // pred_check
          %p335 = pneg %p158
        $region42: #{pointnet_forward.1} parent=31 // pred_check_branch
          %337 = sbr.rel (%p335) target = $region44
        $region43: #{pointnet_forward.1} parent=31 // pred_region
          %s338 = sand.u32 %s23, 1
          %s339 = scalar_lea.sflag [#allocation4], %s338
          %s340 = sand.u32 %s148, 1
          %s341 = smul.addr %s340, 4
          %s342 = scalar_lea.vmem [#allocation12], %s341
          %s344 = ssub.s32 64, 64
          %345 = vsyncadd %s339, %s344
          %s346 = smul.addr %s23, 64
          %s347 = scalar_lea.hbm %s5, %s346
          %s349 = sshll.u32 %s342, 4
          %s350 = int_to_ptr.vmem [resolvable:$true] %s349
          %352 = dma.hbm_to_vmem [thread:$0]  %s347, 64, %s350, %s339
        $region44: #{pointnet_forward.1} parent=31 // pred_fallthru
          _
        // Predicated region
        $region45: #{pointnet_forward.1} parent=31 // pred_check
          %p353 = pneg %p184
        $region46: #{pointnet_forward.1} parent=31 // pred_check_branch
          %355 = sbr.rel (%p353) target = $region48
        $region47: #{pointnet_forward.1} parent=31 // pred_region
          %s356 = sand.u32 %s23, 1
          %s357 = scalar_lea.sflag [#allocation4], %s356
          %s358 = sand.u32 %s174, 1
          %s359 = smul.addr %s358, 8
          %s360 = scalar_lea.vmem [#allocation13], %s359
          %s362 = ssub.s32 128, 128
          %363 = vsyncadd %s357, %s362
          %s364 = smul.addr %s23, 128
          %s365 = scalar_lea.hbm %s6, %s364
          %s367 = sshll.u32 %s360, 4
          %s368 = int_to_ptr.vmem [resolvable:$true] %s367
          %370 = dma.hbm_to_vmem [thread:$0]  %s365, 128, %s368, %s357
        $region48: #{pointnet_forward.1} parent=31 // pred_fallthru
          _
      $region32: #{pointnet_forward.1} parent=5 // pred_fallthru
        _
      %p371 = scmp.le.s32.totalorder 1, %s23
      %p372 = scmp.lt.s32.totalorder %s23, 5
      %p373 = pnand %p371, %p372
      %p374 = pneg %p373
      // Predicated region
      $region49: #{pointnet_forward.1} parent=5 // pred_check
        _
      $region50: #{pointnet_forward.1} parent=5 // pred_check_branch
        %376 = sbr.rel (%p373) target = $region52
      $region51: #{pointnet_forward.1} parent=5 // pred_region
        %s377 = ssub.s32 %s23, 1
        %s378 = sand.u32 %s28, 1
        %s379 = scalar_lea.sflag [#allocation4], %s378
        %s380 = sand.u32 %s36, 1
        %s381 = smul.addr %s380, 8
        %s382 = scalar_lea.vmem [#allocation3], %s381
        // Predicated region
        $region53: #{pointnet_forward.1} parent=51 // pred_check
          %p383 = pneg %p49
        $region54: #{pointnet_forward.1} parent=51 // pred_check_branch
          %385 = sbr.rel (%p383) target = $region56
        $region55: #{pointnet_forward.1} parent=51 // pred_region
          %386 = dma.done %s379, 128
        $region56: #{pointnet_forward.1} parent=51 // pred_fallthru
          _
        // Predicated region
        $region57: #{pointnet_forward.1} parent=51 // pred_check
          %p387 = pneg %p70
        $region58: #{pointnet_forward.1} parent=51 // pred_check_branch
          %389 = sbr.rel (%p387) target = $region60
        $region59: #{pointnet_forward.1} parent=51 // pred_region
          %390 = dma.done [#allocation7], 1280
        $region60: #{pointnet_forward.1} parent=51 // pred_fallthru
          _
        // Predicated region
        $region61: #{pointnet_forward.1} parent=51 // pred_check
          %p391 = pneg %p91
        $region62: #{pointnet_forward.1} parent=51 // pred_check_branch
          %393 = sbr.rel (%p391) target = $region64
        $region63: #{pointnet_forward.1} parent=51 // pred_region
          %394 = dma.done [#allocation7], 12288
        $region64: #{pointnet_forward.1} parent=51 // pred_fallthru
          _
        // Predicated region
        $region65: #{pointnet_forward.1} parent=51 // pred_check
          %p395 = pneg %p112
        $region66: #{pointnet_forward.1} parent=51 // pred_check_branch
          %397 = sbr.rel (%p395) target = $region68
        $region67: #{pointnet_forward.1} parent=51 // pred_region
          %398 = dma.done [#allocation10], 128
        $region68: #{pointnet_forward.1} parent=51 // pred_fallthru
          _
        %s399 = sand.u32 %s28, 1
        %s400 = scalar_lea.sflag [#allocation4], %s399
        %s401 = sand.u32 %s125, 1
        %s402 = smul.addr %s401, 4
        %s403 = scalar_lea.vmem [#allocation11], %s402
        // Predicated region
        $region69: #{pointnet_forward.1} parent=51 // pred_check
          %p404 = pneg %p138
        $region70: #{pointnet_forward.1} parent=51 // pred_check_branch
          %406 = sbr.rel (%p404) target = $region72
        $region71: #{pointnet_forward.1} parent=51 // pred_region
          %407 = dma.done %s400, 64
        $region72: #{pointnet_forward.1} parent=51 // pred_fallthru
          _
        %s408 = sand.u32 %s28, 1
        %s409 = scalar_lea.sflag [#allocation4], %s408
        %s410 = sand.u32 %s151, 1
        %s411 = smul.addr %s410, 4
        %s412 = scalar_lea.vmem [#allocation12], %s411
        // Predicated region
        $region73: #{pointnet_forward.1} parent=51 // pred_check
          %p413 = pneg %p164
        $region74: #{pointnet_forward.1} parent=51 // pred_check_branch
          %415 = sbr.rel (%p413) target = $region76
        $region75: #{pointnet_forward.1} parent=51 // pred_region
          %416 = dma.done %s409, 64
        $region76: #{pointnet_forward.1} parent=51 // pred_fallthru
          _
        %s417 = sand.u32 %s28, 1
        %s418 = scalar_lea.sflag [#allocation4], %s417
        %s419 = sand.u32 %s177, 1
        %s420 = smul.addr %s419, 8
        %s421 = scalar_lea.vmem [#allocation13], %s420
        // Predicated region
        $region77: #{pointnet_forward.1} parent=51 // pred_check
          %p422 = pneg %p190
        $region78: #{pointnet_forward.1} parent=51 // pred_check_branch
          %424 = sbr.rel (%p422) target = $region80
        $region79: #{pointnet_forward.1} parent=51 // pred_region
          %425 = dma.done %s418, 128
        $region80: #{pointnet_forward.1} parent=51 // pred_fallthru
          _
        %s426 = sand.u32 %s28, 1
        %s427 = scalar_lea.sflag [#allocation4], %s426
        %s428 = sand.u32 %s36, 1
        %s429 = smul.addr %s428, 8
        %s430 = scalar_lea.vmem [#allocation3], %s429
        %p431 = pneg %p49
        %p432 = pneg %p46
        %p433 = pneg %p70
        %p434 = pneg %p67
        %p435 = pneg %p91
        %p436 = pneg %p88
        %p437 = pneg %p112
        %p438 = pneg %p109
        %s439 = sand.u32 %s28, 1
        %s440 = scalar_lea.sflag [#allocation4], %s439
        %s441 = sand.u32 %s125, 1
        %s442 = smul.addr %s441, 4
        %s443 = scalar_lea.vmem [#allocation11], %s442
        %p444 = pneg %p138
        %p445 = pneg %p135
        %s446 = sand.u32 %s28, 1
        %s447 = scalar_lea.sflag [#allocation4], %s446
        %s448 = sand.u32 %s151, 1
        %s449 = smul.addr %s448, 4
        %s450 = scalar_lea.vmem [#allocation12], %s449
        %p451 = pneg %p164
        %p452 = pneg %p161
        %s453 = sand.u32 %s28, 1
        %s454 = scalar_lea.sflag [#allocation4], %s453
        %s455 = sand.u32 %s177, 1
        %s456 = smul.addr %s455, 8
        %s457 = scalar_lea.vmem [#allocation13], %s456
        %p458 = pneg %p190
        %p459 = pneg %p187
        %p460 = pneg %p211
        %p461 = pneg %p208
        %p462 = pneg %p237
        %p463 = pneg %p234
        %s464 = sand.u32 %s224, 1
        %s465 = scalar_lea.sflag [#allocation5], %s464
        %s466 = sand.u32 %s224, 1
        %s467 = smul.addr %s466, 8
        %s468 = scalar_lea.vmem [#allocation14], %s467
        %v470 = vld [vmem:[%s382] sm:$0xff]
        %v471 = vld [vmem:[#allocation6] sm:$0xf]
        %v472 = vld [vmem:[#allocation6 + $0x4] sm:$0xf]
        %v473 = vld [vmem:[#allocation6 + $0x8] sm:$0xf]
        %v474 = vld [vmem:[#allocation6 + $0xc] sm:$0xf]
        %v475 = vld [vmem:[#allocation6 + $0x10] sm:$0xf]
        %v476 = vld [vmem:[#allocation6 + $0x14] sm:$0xf]
        %v477 = vld [vmem:[#allocation6 + $0x18] sm:$0xf]
        %v478 = vld [vmem:[#allocation6 + $0x1c] sm:$0xf]
        %v479 = vld [vmem:[#allocation6 + $0x20] sm:$0xf]
        %v480 = vld [vmem:[#allocation6 + $0x24] sm:$0xf]
        %v481 = vld [vmem:[#allocation6 + $0x28] sm:$0xf]
        %v482 = vld [vmem:[#allocation6 + $0x2c] sm:$0xf]
        %v483 = vld [vmem:[#allocation6 + $0x30] sm:$0xf]
        %v484 = vld [vmem:[#allocation6 + $0x34] sm:$0xf]
        %v485 = vld [vmem:[#allocation6 + $0x38] sm:$0xf]
        %v486 = vld [vmem:[#allocation6 + $0x3c] sm:$0xf]
        %v487 = vld [vmem:[#allocation6 + $0x40] sm:$0xf]
        %v488 = vld [vmem:[#allocation6 + $0x44] sm:$0xf]
        %v489 = vld [vmem:[#allocation6 + $0x48] sm:$0xf]
        %v490 = vld [vmem:[#allocation6 + $0x4c] sm:$0xf]
        %v492 = vunpack.c.l.b16 %v470
        %v493 = vunpack.c.h.b16 %v470
        %v494 = vpack.c.b16 %v492, %v492
        %v495 = vpack.c.b16 %v493, %v493
        %v517 = vunpack.c.l.b16 %v471
        %v518 = vunpack.c.l.b16 %v472
        %v519 = vunpack.c.l.b16 %v473
        %v520 = vunpack.c.l.b16 %v474
        %v521 = vunpack.c.l.b16 %v475
        %v522 = vunpack.c.l.b16 %v476
        %v523 = vunpack.c.l.b16 %v477
        %v524 = vunpack.c.l.b16 %v478
        %v525 = vunpack.c.l.b16 %v479
        %v526 = vunpack.c.l.b16 %v480
        %v527 = vunpack.c.l.b16 %v481
        %v528 = vunpack.c.l.b16 %v482
        %v529 = vunpack.c.l.b16 %v483
        %v530 = vunpack.c.l.b16 %v484
        %v531 = vunpack.c.l.b16 %v485
        %v532 = vunpack.c.l.b16 %v486
        %v533 = vunpack.c.l.b16 %v487
        %v534 = vunpack.c.l.b16 %v488
        %v535 = vunpack.c.l.b16 %v489
        %v536 = vunpack.c.l.b16 %v490
        %v537 = vpack.c.b16 %v518, %v517
        %v538 = vpack.c.b16 %v520, %v519
        %v539 = vpack.c.b16 %v522, %v521
        %v540 = vpack.c.b16 %v524, %v523
        %v541 = vpack.c.b16 %v526, %v525
        %v542 = vpack.c.b16 %v528, %v527
        %v543 = vpack.c.b16 %v530, %v529
        %v544 = vpack.c.b16 %v532, %v531
        %v545 = vpack.c.b16 %v534, %v533
        %v546 = vpack.c.b16 %v536, %v535
        %vm557 = vcmask 261120
        %v559 = vsel %vm557, %v495, 0
        %561 = vmatprep.subr.bf16.mxu0 0
        %562 = vmatpush1.bf16.msra.mxu0 %v544
        %563 = vmatprep.subr.bf16.mxu0 0
        %564 = vmatpush1.bf16.msra.mxu0 %v543
        %565 = vmatprep.subr.bf16.mxu0 0
        %566 = vmatpush1.bf16.msra.mxu0 %v542
        %567 = vmatprep.subr.bf16.mxu0 0
        %568 = vmatpush1.bf16.msra.mxu0 %v541
        %569 = vmatprep.subr.bf16.mxu0 0
        %570 = vmatpush1.bf16.msra.mxu0 %v540
        %571 = vmatprep.subr.bf16.mxu0 0
        %572 = vmatpush1.bf16.msra.mxu0 %v539
        %573 = vmatprep.subr.bf16.mxu0 0
        %574 = vmatpush1.bf16.msra.mxu0 %v538
        %575 = vmatprep.subr.bf16.mxu0 0
        %576 = vmatpush1.bf16.msra.mxu0 %v537
        %577 = vmatprep.subr.bf16.mxu0 0
        %578 = vmatpush2.bf16.msra.mxu0 0
        %579 = vmatprep.subr.bf16.mxu0 0
        %580 = vmatpush2.bf16.msra.mxu0 0
        %581 = vmatprep.subr.bf16.mxu0 0
        %582 = vmatpush2.bf16.msra.mxu0 0
        %583 = vmatprep.subr.bf16.mxu0 0
        %584 = vmatpush2.bf16.msra.mxu0 0
        %585 = vmatprep.subr.bf16.mxu0 0
        %586 = vmatpush2.bf16.msra.mxu0 0
        %587 = vmatprep.subr.bf16.mxu0 0
        %588 = vmatpush2.bf16.msra.mxu0 0
        %589 = vmatprep.subr.bf16.mxu0 0
        %590 = vmatpush2.bf16.msra.mxu0 %v546
        %591 = vmatprep.subr.bf16.mxu0 0
        %592 = vmatpush2.bf16.msra.mxu0 %v545
        %593 = vmatprep.mubr.bf16.mxu0 %v559
        %594 = vmatmul.mubr.bf16.gmra.mxu0 %v494
        %v595 = vpop.f32.mrf.mxu0
        %v596 = vadd.f32 0.0, %v595
        %v597 = vpop.f32.mrf.mxu0
        %v598 = vpop.f32.mrf.mxu0
        %v599 = vpop.f32.mrf.mxu0
        %600 = vdwg.mxu0
        %v601 = vld [vmem:[%s403] sm:$0xf]
        %v602 = vld [vmem:[%s412] sm:$0xf]
        %v603 = vpack.c.bf16 %v596, %v596
        %v604 = vld [vmem:[#allocation8] sm:$0xf]
        %v605 = vld [vmem:[#allocation8 + $0x4] sm:$0xf]
        %v606 = vld [vmem:[#allocation8 + $0x8] sm:$0xf]
        %v607 = vld [vmem:[#allocation8 + $0xc] sm:$0xf]
        %v608 = vld [vmem:[#allocation8 + $0x10] sm:$0xf]
        %v609 = vld [vmem:[#allocation8 + $0x14] sm:$0xf]
        %v610 = vld [vmem:[#allocation8 + $0x18] sm:$0xf]
        %v611 = vld [vmem:[#allocation8 + $0x1c] sm:$0xf]
        %v612 = vld [vmem:[#allocation8 + $0x20] sm:$0xf]
        %v613 = vld [vmem:[#allocation8 + $0x24] sm:$0xf]
        %v614 = vld [vmem:[#allocation8 + $0x28] sm:$0xf]
        %v615 = vld [vmem:[#allocation8 + $0x2c] sm:$0xf]
        %v616 = vld [vmem:[#allocation8 + $0x30] sm:$0xf]
        %v617 = vld [vmem:[#allocation8 + $0x34] sm:$0xf]
        %v618 = vld [vmem:[#allocation8 + $0x38] sm:$0xf]
        %v619 = vld [vmem:[#allocation8 + $0x3c] sm:$0xf]
        %v620 = vld [vmem:[#allocation9] sm:$0x1]
        %v621 = vunpack.c.l.bf16 %v620
        %v622 = vlaneseq
        %v623 = vshrl.u32 %v622, 7
        %v624 = vsub.s32 0, %v623
        %v625 = vrot.slane %v621, %v624
        %v642 = vunpack.c.l.b16 %v604
        %v643 = vunpack.c.l.b16 %v605
        %v644 = vunpack.c.l.b16 %v606
        %v645 = vunpack.c.l.b16 %v607
        %v646 = vunpack.c.l.b16 %v608
        %v647 = vunpack.c.l.b16 %v609
        %v648 = vunpack.c.l.b16 %v610
        %v649 = vunpack.c.l.b16 %v611
        %v650 = vunpack.c.l.b16 %v612
        %v651 = vunpack.c.l.b16 %v613
        %v652 = vunpack.c.l.b16 %v614
        %v653 = vunpack.c.l.b16 %v615
        %v654 = vunpack.c.l.b16 %v616
        %v655 = vunpack.c.l.b16 %v617
        %v656 = vunpack.c.l.b16 %v618
        %v657 = vunpack.c.l.b16 %v619
        %v658 = vpack.c.b16 %v643, %v642
        %v659 = vpack.c.b16 %v645, %v644
        %v660 = vpack.c.b16 %v647, %v646
        %v661 = vpack.c.b16 %v649, %v648
        %v662 = vpack.c.b16 %v651, %v650
        %v663 = vpack.c.b16 %v653, %v652
        %v664 = vpack.c.b16 %v655, %v654
        %v665 = vpack.c.b16 %v657, %v656
        %674 = vmatprep.subr.bf16.mxu0 0
        %675 = vmatpush1.bf16.msra.mxu0 %v665
        %676 = vmatprep.subr.bf16.mxu0 0
        %677 = vmatpush1.bf16.msra.mxu0 %v664
        %678 = vmatprep.subr.bf16.mxu0 0
        %679 = vmatpush1.bf16.msra.mxu0 %v663
        %680 = vmatprep.subr.bf16.mxu0 0
        %681 = vmatpush1.bf16.msra.mxu0 %v662
        %682 = vmatprep.subr.bf16.mxu0 0
        %683 = vmatpush1.bf16.msra.mxu0 %v661
        %684 = vmatprep.subr.bf16.mxu0 0
        %685 = vmatpush1.bf16.msra.mxu0 %v660
        %686 = vmatprep.subr.bf16.mxu0 0
        %687 = vmatpush1.bf16.msra.mxu0 %v659
        %688 = vmatprep.subr.bf16.mxu0 0
        %689 = vmatpush1.bf16.msra.mxu0 %v658
        %690 = vmatprep.subr.bf16.mxu0 0
        %691 = vmatpush2.bf16.msra.mxu0 0
        %692 = vmatprep.subr.bf16.mxu0 0
        %693 = vmatpush2.bf16.msra.mxu0 0
        %694 = vmatprep.subr.bf16.mxu0 0
        %695 = vmatpush2.bf16.msra.mxu0 0
        %696 = vmatprep.subr.bf16.mxu0 0
        %697 = vmatpush2.bf16.msra.mxu0 0
        %698 = vmatprep.subr.bf16.mxu0 0
        %699 = vmatpush2.bf16.msra.mxu0 0
        %700 = vmatprep.subr.bf16.mxu0 0
        %701 = vmatpush2.bf16.msra.mxu0 0
        %702 = vmatprep.subr.bf16.mxu0 0
        %703 = vmatpush2.bf16.msra.mxu0 0
        %704 = vmatprep.subr.bf16.mxu0 0
        %705 = vmatpush2.bf16.msra.mxu0 0
        %706 = vmatprep.mubr.bf16.mxu0 0
        %707 = vmatmul.mubr.bf16.gmra.mxu0 %v603
        %v708 = vpop.f32.mrf.mxu0
        %v709 = vadd.f32 %v625, %v708
        %v710 = vpop.f32.mrf.mxu0
        %v711 = vpop.f32.mrf.mxu0
        %v712 = vpop.f32.mrf.mxu0
        %713 = vdwg.mxu0
        %vm714 = vcmp.ge.f32.partialorder %v709, 0.0
        %v715 = vmul.f32 %v709, 0.01
        %v716 = vsel %vm714, %v709, %v715
        %v717 = vpack.c.bf16 %v716, %v716
        %s718 = scalar_lea.vmem [#allocation8], 64
        %v719 = vld [vmem:[%s718] sm:$0xf]
        %v720 = vld [vmem:[%s718 + $0x4] sm:$0xf]
        %v721 = vld [vmem:[%s718 + $0x8] sm:$0xf]
        %v722 = vld [vmem:[%s718 + $0xc] sm:$0xf]
        %v723 = vld [vmem:[%s718 + $0x10] sm:$0xf]
        %v724 = vld [vmem:[%s718 + $0x14] sm:$0xf]
        %v725 = vld [vmem:[%s718 + $0x18] sm:$0xf]
        %v726 = vld [vmem:[%s718 + $0x1c] sm:$0xf]
        %v727 = vld [vmem:[%s718 + $0x20] sm:$0xf]
        %v728 = vld [vmem:[%s718 + $0x24] sm:$0xf]
        %v729 = vld [vmem:[%s718 + $0x28] sm:$0xf]
        %v730 = vld [vmem:[%s718 + $0x2c] sm:$0xf]
        %v731 = vld [vmem:[%s718 + $0x30] sm:$0xf]
        %v732 = vld [vmem:[%s718 + $0x34] sm:$0xf]
        %v733 = vld [vmem:[%s718 + $0x38] sm:$0xf]
        %v734 = vld [vmem:[%s718 + $0x3c] sm:$0xf]
        %v735 = vlaneseq
        %v736 = vshrl.u32 %v735, 7
        %v737 = vsub.s32 1, %v736
        %v738 = vrot.slane %v621, %v737
        %v755 = vunpack.c.l.b16 %v719
        %v756 = vunpack.c.l.b16 %v720
        %v757 = vunpack.c.l.b16 %v721
        %v758 = vunpack.c.l.b16 %v722
        %v759 = vunpack.c.l.b16 %v723
        %v760 = vunpack.c.l.b16 %v724
        %v761 = vunpack.c.l.b16 %v725
        %v762 = vunpack.c.l.b16 %v726
        %v763 = vunpack.c.l.b16 %v727
        %v764 = vunpack.c.l.b16 %v728
        %v765 = vunpack.c.l.b16 %v729
        %v766 = vunpack.c.l.b16 %v730
        %v767 = vunpack.c.l.b16 %v731
        %v768 = vunpack.c.l.b16 %v732
        %v769 = vunpack.c.l.b16 %v733
        %v770 = vunpack.c.l.b16 %v734
        %v771 = vpack.c.b16 %v756, %v755
        %v772 = vpack.c.b16 %v758, %v757
        %v773 = vpack.c.b16 %v760, %v759
        %v774 = vpack.c.b16 %v762, %v761
        %v775 = vpack.c.b16 %v764, %v763
        %v776 = vpack.c.b16 %v766, %v765
        %v777 = vpack.c.b16 %v768, %v767
        %v778 = vpack.c.b16 %v770, %v769
        %787 = vmatprep.subr.bf16.mxu0 0
        %788 = vmatpush1.bf16.msra.mxu0 %v778
        %789 = vmatprep.subr.bf16.mxu0 0
        %790 = vmatpush1.bf16.msra.mxu0 %v777
        %791 = vmatprep.subr.bf16.mxu0 0
        %792 = vmatpush1.bf16.msra.mxu0 %v776
        %793 = vmatprep.subr.bf16.mxu0 0
        %794 = vmatpush1.bf16.msra.mxu0 %v775
        %795 = vmatprep.subr.bf16.mxu0 0
        %796 = vmatpush1.bf16.msra.mxu0 %v774
        %797 = vmatprep.subr.bf16.mxu0 0
        %798 = vmatpush1.bf16.msra.mxu0 %v773
        %799 = vmatprep.subr.bf16.mxu0 0
        %800 = vmatpush1.bf16.msra.mxu0 %v772
        %801 = vmatprep.subr.bf16.mxu0 0
        %802 = vmatpush1.bf16.msra.mxu0 %v771
        %803 = vmatprep.subr.bf16.mxu0 0
        %804 = vmatpush2.bf16.msra.mxu0 0
        %805 = vmatprep.subr.bf16.mxu0 0
        %806 = vmatpush2.bf16.msra.mxu0 0
        %807 = vmatprep.subr.bf16.mxu0 0
        %808 = vmatpush2.bf16.msra.mxu0 0
        %809 = vmatprep.subr.bf16.mxu0 0
        %810 = vmatpush2.bf16.msra.mxu0 0
        %811 = vmatprep.subr.bf16.mxu0 0
        %812 = vmatpush2.bf16.msra.mxu0 0
        %813 = vmatprep.subr.bf16.mxu0 0
        %814 = vmatpush2.bf16.msra.mxu0 0
        %815 = vmatprep.subr.bf16.mxu0 0
        %816 = vmatpush2.bf16.msra.mxu0 0
        %817 = vmatprep.subr.bf16.mxu0 0
        %818 = vmatpush2.bf16.msra.mxu0 0
        %819 = vmatprep.mubr.bf16.mxu0 0
        %820 = vmatmul.mubr.bf16.gmra.mxu0 %v717
        %v821 = vpop.f32.mrf.mxu0
        %v822 = vadd.f32 %v738, %v821
        %v823 = vpop.f32.mrf.mxu0
        %v824 = vpop.f32.mrf.mxu0
        %v825 = vpop.f32.mrf.mxu0
        %826 = vdwg.mxu0
        %vm827 = vcmp.ge.f32.partialorder %v822, 0.0
        %v828 = vmul.f32 %v822, 0.01
        %v829 = vsel %vm827, %v822, %v828
        %v830 = vpack.c.bf16 %v829, %v829
        %vm831 = vcmask 64512
        %v833 = vsel %vm831, %v601, 0
        %vm835 = vcmask 1043456
        %v837 = vsel %vm835, %v830, 0
        %839 = vmatprep.subr.bf16.mxu0 0
        %840 = vmatpush1.bf16.msra.mxu0 0
        %841 = vmatprep.subr.bf16.mxu0 0
        %842 = vmatpush1.bf16.msra.mxu0 0
        %843 = vmatprep.subr.bf16.mxu0 0
        %844 = vmatpush1.bf16.msra.mxu0 0
        %845 = vmatprep.subr.bf16.mxu0 0
        %846 = vmatpush1.bf16.msra.mxu0 0
        %847 = vmatprep.subr.bf16.mxu0 0
        %848 = vmatpush1.bf16.msra.mxu0 0
        %849 = vmatprep.subr.bf16.mxu0 0
        %850 = vmatpush1.bf16.msra.mxu0 0
        %851 = vmatprep.subr.bf16.mxu0 0
        %852 = vmatpush1.bf16.msra.mxu0 0
        %853 = vmatprep.subr.bf16.mxu0 0
        %854 = vmatpush1.bf16.msra.mxu0 %v837
        %855 = vmatprep.subr.bf16.mxu0 0
        %856 = vmatpush2.bf16.msra.mxu0 0
        %857 = vmatprep.subr.bf16.mxu0 0
        %858 = vmatpush2.bf16.msra.mxu0 0
        %859 = vmatprep.subr.bf16.mxu0 0
        %860 = vmatpush2.bf16.msra.mxu0 0
        %861 = vmatprep.subr.bf16.mxu0 0
        %862 = vmatpush2.bf16.msra.mxu0 0
        %863 = vmatprep.subr.bf16.mxu0 0
        %864 = vmatpush2.bf16.msra.mxu0 0
        %865 = vmatprep.subr.bf16.mxu0 0
        %866 = vmatpush2.bf16.msra.mxu0 0
        %867 = vmatprep.subr.bf16.mxu0 0
        %868 = vmatpush2.bf16.msra.mxu0 0
        %869 = vmatprep.subr.bf16.mxu0 0
        %870 = vmatpush2.bf16.msra.mxu0 0
        %871 = vmatprep.mubr.bf16.mxu0 0
        %872 = vmatmul.mubr.bf16.gmra.mxu0 %v833
        %v873 = vpop.f32.mrf.mxu0
        %v874 = vadd.f32 0.0, %v873
        %v875 = vpop.f32.mrf.mxu0
        %v876 = vpop.f32.mrf.mxu0
        %v877 = vpop.f32.mrf.mxu0
        %878 = vdwg.mxu0
        %v879 = vpack.c.bf16 %v874, %v874
        %s880 = scalar_lea.vmem [#allocation8], 128
        %v881 = vld [vmem:[%s880] sm:$0xf]
        %v882 = vld [vmem:[%s880 + $0x4] sm:$0xf]
        %v883 = vld [vmem:[%s880 + $0x8] sm:$0xf]
        %v884 = vld [vmem:[%s880 + $0xc] sm:$0xf]
        %v885 = vld [vmem:[%s880 + $0x10] sm:$0xf]
        %v886 = vld [vmem:[%s880 + $0x14] sm:$0xf]
        %v887 = vld [vmem:[%s880 + $0x18] sm:$0xf]
        %v888 = vld [vmem:[%s880 + $0x1c] sm:$0xf]
        %v889 = vld [vmem:[%s880 + $0x20] sm:$0xf]
        %v890 = vld [vmem:[%s880 + $0x24] sm:$0xf]
        %v891 = vld [vmem:[%s880 + $0x28] sm:$0xf]
        %v892 = vld [vmem:[%s880 + $0x2c] sm:$0xf]
        %v893 = vld [vmem:[%s880 + $0x30] sm:$0xf]
        %v894 = vld [vmem:[%s880 + $0x34] sm:$0xf]
        %v895 = vld [vmem:[%s880 + $0x38] sm:$0xf]
        %v896 = vld [vmem:[%s880 + $0x3c] sm:$0xf]
        %v897 = vld [vmem:[#allocation9] sm:$0x2]
        %v898 = vunpack.c.l.bf16 %v897
        %v899 = vlaneseq
        %v900 = vshrl.u32 %v899, 7
        %v901 = vsub.s32 2, %v900
        %v902 = vrot.slane %v898, %v901
        %v919 = vunpack.c.l.b16 %v881
        %v920 = vunpack.c.l.b16 %v882
        %v921 = vunpack.c.l.b16 %v883
        %v922 = vunpack.c.l.b16 %v884
        %v923 = vunpack.c.l.b16 %v885
        %v924 = vunpack.c.l.b16 %v886
        %v925 = vunpack.c.l.b16 %v887
        %v926 = vunpack.c.l.b16 %v888
        %v927 = vunpack.c.l.b16 %v889
        %v928 = vunpack.c.l.b16 %v890
        %v929 = vunpack.c.l.b16 %v891
        %v930 = vunpack.c.l.b16 %v892
        %v931 = vunpack.c.l.b16 %v893
        %v932 = vunpack.c.l.b16 %v894
        %v933 = vunpack.c.l.b16 %v895
        %v934 = vunpack.c.l.b16 %v896
        %v935 = vpack.c.b16 %v920, %v919
        %v936 = vpack.c.b16 %v922, %v921
        %v937 = vpack.c.b16 %v924, %v923
        %v938 = vpack.c.b16 %v926, %v925
        %v939 = vpack.c.b16 %v928, %v927
        %v940 = vpack.c.b16 %v930, %v929
        %v941 = vpack.c.b16 %v932, %v931
        %v942 = vpack.c.b16 %v934, %v933
        %951 = vmatprep.subr.bf16.mxu0 0
        %952 = vmatpush1.bf16.msra.mxu0 %v942
        %953 = vmatprep.subr.bf16.mxu0 0
        %954 = vmatpush1.bf16.msra.mxu0 %v941
        %955 = vmatprep.subr.bf16.mxu0 0
        %956 = vmatpush1.bf16.msra.mxu0 %v940
        %957 = vmatprep.subr.bf16.mxu0 0
        %958 = vmatpush1.bf16.msra.mxu0 %v939
        %959 = vmatprep.subr.bf16.mxu0 0
        %960 = vmatpush1.bf16.msra.mxu0 %v938
        %961 = vmatprep.subr.bf16.mxu0 0
        %962 = vmatpush1.bf16.msra.mxu0 %v937
        %963 = vmatprep.subr.bf16.mxu0 0
        %964 = vmatpush1.bf16.msra.mxu0 %v936
        %965 = vmatprep.subr.bf16.mxu0 0
        %966 = vmatpush1.bf16.msra.mxu0 %v935
        %967 = vmatprep.subr.bf16.mxu0 0
        %968 = vmatpush2.bf16.msra.mxu0 0
        %969 = vmatprep.subr.bf16.mxu0 0
        %970 = vmatpush2.bf16.msra.mxu0 0
        %971 = vmatprep.subr.bf16.mxu0 0
        %972 = vmatpush2.bf16.msra.mxu0 0
        %973 = vmatprep.subr.bf16.mxu0 0
        %974 = vmatpush2.bf16.msra.mxu0 0
        %975 = vmatprep.subr.bf16.mxu0 0
        %976 = vmatpush2.bf16.msra.mxu0 0
        %977 = vmatprep.subr.bf16.mxu0 0
        %978 = vmatpush2.bf16.msra.mxu0 0
        %979 = vmatprep.subr.bf16.mxu0 0
        %980 = vmatpush2.bf16.msra.mxu0 0
        %981 = vmatprep.subr.bf16.mxu0 0
        %982 = vmatpush2.bf16.msra.mxu0 0
        %983 = vmatprep.mubr.bf16.mxu0 0
        %984 = vmatmul.mubr.bf16.gmra.mxu0 %v879
        %v985 = vpop.f32.mrf.mxu0
        %v986 = vadd.f32 %v902, %v985
        %v987 = vpop.f32.mrf.mxu0
        %v988 = vpop.f32.mrf.mxu0
        %v989 = vpop.f32.mrf.mxu0
        %990 = vdwg.mxu0
        %vm991 = vcmp.ge.f32.partialorder %v986, 0.0
        %v992 = vmul.f32 %v986, 0.01
        %v993 = vsel %vm991, %v986, %v992
        %v994 = vpack.c.bf16 %v993, %v993
        %s995 = scalar_lea.vmem [#allocation8], 192
        %v996 = vld [vmem:[%s995] sm:$0xf]
        %v997 = vld [vmem:[%s995 + $0x4] sm:$0xf]
        %v998 = vld [vmem:[%s995 + $0x8] sm:$0xf]
        %v999 = vld [vmem:[%s995 + $0xc] sm:$0xf]
        %v1000 = vld [vmem:[%s995 + $0x10] sm:$0xf]
        %v1001 = vld [vmem:[%s995 + $0x14] sm:$0xf]
        %v1002 = vld [vmem:[%s995 + $0x18] sm:$0xf]
        %v1003 = vld [vmem:[%s995 + $0x1c] sm:$0xf]
        %v1004 = vld [vmem:[%s995 + $0x20] sm:$0xf]
        %v1005 = vld [vmem:[%s995 + $0x24] sm:$0xf]
        %v1006 = vld [vmem:[%s995 + $0x28] sm:$0xf]
        %v1007 = vld [vmem:[%s995 + $0x2c] sm:$0xf]
        %v1008 = vld [vmem:[%s995 + $0x30] sm:$0xf]
        %v1009 = vld [vmem:[%s995 + $0x34] sm:$0xf]
        %v1010 = vld [vmem:[%s995 + $0x38] sm:$0xf]
        %v1011 = vld [vmem:[%s995 + $0x3c] sm:$0xf]
        %v1012 = vlaneseq
        %v1013 = vshrl.u32 %v1012, 7
        %v1014 = vsub.s32 3, %v1013
        %v1015 = vrot.slane %v898, %v1014
        %v1032 = vunpack.c.l.b16 %v996
        %v1033 = vunpack.c.l.b16 %v997
        %v1034 = vunpack.c.l.b16 %v998
        %v1035 = vunpack.c.l.b16 %v999
        %v1036 = vunpack.c.l.b16 %v1000
        %v1037 = vunpack.c.l.b16 %v1001
        %v1038 = vunpack.c.l.b16 %v1002
        %v1039 = vunpack.c.l.b16 %v1003
        %v1040 = vunpack.c.l.b16 %v1004
        %v1041 = vunpack.c.l.b16 %v1005
        %v1042 = vunpack.c.l.b16 %v1006
        %v1043 = vunpack.c.l.b16 %v1007
        %v1044 = vunpack.c.l.b16 %v1008
        %v1045 = vunpack.c.l.b16 %v1009
        %v1046 = vunpack.c.l.b16 %v1010
        %v1047 = vunpack.c.l.b16 %v1011
        %v1048 = vpack.c.b16 %v1033, %v1032
        %v1049 = vpack.c.b16 %v1035, %v1034
        %v1050 = vpack.c.b16 %v1037, %v1036
        %v1051 = vpack.c.b16 %v1039, %v1038
        %v1052 = vpack.c.b16 %v1041, %v1040
        %v1053 = vpack.c.b16 %v1043, %v1042
        %v1054 = vpack.c.b16 %v1045, %v1044
        %v1055 = vpack.c.b16 %v1047, %v1046
        %1064 = vmatprep.subr.bf16.mxu0 0
        %1065 = vmatpush1.bf16.msra.mxu0 %v1055
        %1066 = vmatprep.subr.bf16.mxu0 0
        %1067 = vmatpush1.bf16.msra.mxu0 %v1054
        %1068 = vmatprep.subr.bf16.mxu0 0
        %1069 = vmatpush1.bf16.msra.mxu0 %v1053
        %1070 = vmatprep.subr.bf16.mxu0 0
        %1071 = vmatpush1.bf16.msra.mxu0 %v1052
        %1072 = vmatprep.subr.bf16.mxu0 0
        %1073 = vmatpush1.bf16.msra.mxu0 %v1051
        %1074 = vmatprep.subr.bf16.mxu0 0
        %1075 = vmatpush1.bf16.msra.mxu0 %v1050
        %1076 = vmatprep.subr.bf16.mxu0 0
        %1077 = vmatpush1.bf16.msra.mxu0 %v1049
        %1078 = vmatprep.subr.bf16.mxu0 0
        %1079 = vmatpush1.bf16.msra.mxu0 %v1048
        %1080 = vmatprep.subr.bf16.mxu0 0
        %1081 = vmatpush2.bf16.msra.mxu0 0
        %1082 = vmatprep.subr.bf16.mxu0 0
        %1083 = vmatpush2.bf16.msra.mxu0 0
        %1084 = vmatprep.subr.bf16.mxu0 0
        %1085 = vmatpush2.bf16.msra.mxu0 0
        %1086 = vmatprep.subr.bf16.mxu0 0
        %1087 = vmatpush2.bf16.msra.mxu0 0
        %1088 = vmatprep.subr.bf16.mxu0 0
        %1089 = vmatpush2.bf16.msra.mxu0 0
        %1090 = vmatprep.subr.bf16.mxu0 0
        %1091 = vmatpush2.bf16.msra.mxu0 0
        %1092 = vmatprep.subr.bf16.mxu0 0
        %1093 = vmatpush2.bf16.msra.mxu0 0
        %1094 = vmatprep.subr.bf16.mxu0 0
        %1095 = vmatpush2.bf16.msra.mxu0 0
        %1096 = vmatprep.mubr.bf16.mxu0 0
        %1097 = vmatmul.mubr.bf16.gmra.mxu0 %v994
        %v1098 = vpop.f32.mrf.mxu0
        %v1099 = vadd.f32 %v1015, %v1098
        %v1100 = vpop.f32.mrf.mxu0
        %v1101 = vpop.f32.mrf.mxu0
        %v1102 = vpop.f32.mrf.mxu0
        %1103 = vdwg.mxu0
        %vm1104 = vcmp.ge.f32.partialorder %v1099, 0.0
        %v1105 = vmul.f32 %v1099, 0.01
        %v1106 = vsel %vm1104, %v1099, %v1105
        %v1107 = vpack.c.bf16 %v1106, %v1106
        %v1109 = vsel %vm831, %v602, 0
        %v1112 = vsel %vm835, %v1107, 0
        %1114 = vmatprep.subr.bf16.mxu0 0
        %1115 = vmatpush1.bf16.msra.mxu0 0
        %1116 = vmatprep.subr.bf16.mxu0 0
        %1117 = vmatpush1.bf16.msra.mxu0 0
        %1118 = vmatprep.subr.bf16.mxu0 0
        %1119 = vmatpush1.bf16.msra.mxu0 0
        %1120 = vmatprep.subr.bf16.mxu0 0
        %1121 = vmatpush1.bf16.msra.mxu0 0
        %1122 = vmatprep.subr.bf16.mxu0 0
        %1123 = vmatpush1.bf16.msra.mxu0 0
        %1124 = vmatprep.subr.bf16.mxu0 0
        %1125 = vmatpush1.bf16.msra.mxu0 0
        %1126 = vmatprep.subr.bf16.mxu0 0
        %1127 = vmatpush1.bf16.msra.mxu0 0
        %1128 = vmatprep.subr.bf16.mxu0 0
        %1129 = vmatpush1.bf16.msra.mxu0 %v1112
        %1130 = vmatprep.subr.bf16.mxu0 0
        %1131 = vmatpush2.bf16.msra.mxu0 0
        %1132 = vmatprep.subr.bf16.mxu0 0
        %1133 = vmatpush2.bf16.msra.mxu0 0
        %1134 = vmatprep.subr.bf16.mxu0 0
        %1135 = vmatpush2.bf16.msra.mxu0 0
        %1136 = vmatprep.subr.bf16.mxu0 0
        %1137 = vmatpush2.bf16.msra.mxu0 0
        %1138 = vmatprep.subr.bf16.mxu0 0
        %1139 = vmatpush2.bf16.msra.mxu0 0
        %1140 = vmatprep.subr.bf16.mxu0 0
        %1141 = vmatpush2.bf16.msra.mxu0 0
        %1142 = vmatprep.subr.bf16.mxu0 0
        %1143 = vmatpush2.bf16.msra.mxu0 0
        %1144 = vmatprep.subr.bf16.mxu0 0
        %1145 = vmatpush2.bf16.msra.mxu0 0
        %1146 = vmatprep.mubr.bf16.mxu0 0
        %1147 = vmatmul.mubr.bf16.gmra.mxu0 %v1109
        %v1148 = vpop.f32.mrf.mxu0
        %v1149 = vadd.f32 0.0, %v1148
        %v1150 = vpop.f32.mrf.mxu0
        %v1151 = vpop.f32.mrf.mxu0
        %v1152 = vpop.f32.mrf.mxu0
        %1153 = vdwg.mxu0
        %v1154 = vadd.f32 %v829, %v1149
        %v1155 = vpack.c.bf16 %v1154, %v1154
        %s1156 = scalar_lea.vmem [#allocation8], 256
        %v1157 = vld [vmem:[%s1156] sm:$0xf]
        %v1158 = vld [vmem:[%s1156 + $0x4] sm:$0xf]
        %v1159 = vld [vmem:[%s1156 + $0x8] sm:$0xf]
        %v1160 = vld [vmem:[%s1156 + $0xc] sm:$0xf]
        %v1161 = vld [vmem:[%s1156 + $0x10] sm:$0xf]
        %v1162 = vld [vmem:[%s1156 + $0x14] sm:$0xf]
        %v1163 = vld [vmem:[%s1156 + $0x18] sm:$0xf]
        %v1164 = vld [vmem:[%s1156 + $0x1c] sm:$0xf]
        %v1165 = vld [vmem:[%s1156 + $0x20] sm:$0xf]
        %v1166 = vld [vmem:[%s1156 + $0x24] sm:$0xf]
        %v1167 = vld [vmem:[%s1156 + $0x28] sm:$0xf]
        %v1168 = vld [vmem:[%s1156 + $0x2c] sm:$0xf]
        %v1169 = vld [vmem:[%s1156 + $0x30] sm:$0xf]
        %v1170 = vld [vmem:[%s1156 + $0x34] sm:$0xf]
        %v1171 = vld [vmem:[%s1156 + $0x38] sm:$0xf]
        %v1172 = vld [vmem:[%s1156 + $0x3c] sm:$0xf]
        %v1173 = vld [vmem:[#allocation9] sm:$0x4]
        %v1174 = vunpack.c.l.bf16 %v1173
        %v1175 = vlaneseq
        %v1176 = vshrl.u32 %v1175, 7
        %v1177 = vsub.s32 4, %v1176
        %v1178 = vrot.slane %v1174, %v1177
        %v1195 = vunpack.c.l.b16 %v1157
        %v1196 = vunpack.c.l.b16 %v1158
        %v1197 = vunpack.c.l.b16 %v1159
        %v1198 = vunpack.c.l.b16 %v1160
        %v1199 = vunpack.c.l.b16 %v1161
        %v1200 = vunpack.c.l.b16 %v1162
        %v1201 = vunpack.c.l.b16 %v1163
        %v1202 = vunpack.c.l.b16 %v1164
        %v1203 = vunpack.c.l.b16 %v1165
        %v1204 = vunpack.c.l.b16 %v1166
        %v1205 = vunpack.c.l.b16 %v1167
        %v1206 = vunpack.c.l.b16 %v1168
        %v1207 = vunpack.c.l.b16 %v1169
        %v1208 = vunpack.c.l.b16 %v1170
        %v1209 = vunpack.c.l.b16 %v1171
        %v1210 = vunpack.c.l.b16 %v1172
        %v1211 = vpack.c.b16 %v1196, %v1195
        %v1212 = vpack.c.b16 %v1198, %v1197
        %v1213 = vpack.c.b16 %v1200, %v1199
        %v1214 = vpack.c.b16 %v1202, %v1201
        %v1215 = vpack.c.b16 %v1204, %v1203
        %v1216 = vpack.c.b16 %v1206, %v1205
        %v1217 = vpack.c.b16 %v1208, %v1207
        %v1218 = vpack.c.b16 %v1210, %v1209
        %1227 = vmatprep.subr.bf16.mxu0 0
        %1228 = vmatpush1.bf16.msra.mxu0 %v1218
        %1229 = vmatprep.subr.bf16.mxu0 0
        %1230 = vmatpush1.bf16.msra.mxu0 %v1217
        %1231 = vmatprep.subr.bf16.mxu0 0
        %1232 = vmatpush1.bf16.msra.mxu0 %v1216
        %1233 = vmatprep.subr.bf16.mxu0 0
        %1234 = vmatpush1.bf16.msra.mxu0 %v1215
        %1235 = vmatprep.subr.bf16.mxu0 0
        %1236 = vmatpush1.bf16.msra.mxu0 %v1214
        %1237 = vmatprep.subr.bf16.mxu0 0
        %1238 = vmatpush1.bf16.msra.mxu0 %v1213
        %1239 = vmatprep.subr.bf16.mxu0 0
        %1240 = vmatpush1.bf16.msra.mxu0 %v1212
        %1241 = vmatprep.subr.bf16.mxu0 0
        %1242 = vmatpush1.bf16.msra.mxu0 %v1211
        %1243 = vmatprep.subr.bf16.mxu0 0
        %1244 = vmatpush2.bf16.msra.mxu0 0
        %1245 = vmatprep.subr.bf16.mxu0 0
        %1246 = vmatpush2.bf16.msra.mxu0 0
        %1247 = vmatprep.subr.bf16.mxu0 0
        %1248 = vmatpush2.bf16.msra.mxu0 0
        %1249 = vmatprep.subr.bf16.mxu0 0
        %1250 = vmatpush2.bf16.msra.mxu0 0
        %1251 = vmatprep.subr.bf16.mxu0 0
        %1252 = vmatpush2.bf16.msra.mxu0 0
        %1253 = vmatprep.subr.bf16.mxu0 0
        %1254 = vmatpush2.bf16.msra.mxu0 0
        %1255 = vmatprep.subr.bf16.mxu0 0
        %1256 = vmatpush2.bf16.msra.mxu0 0
        %1257 = vmatprep.subr.bf16.mxu0 0
        %1258 = vmatpush2.bf16.msra.mxu0 0
        %1259 = vmatprep.mubr.bf16.mxu0 0
        %1260 = vmatmul.mubr.bf16.gmra.mxu0 %v1155
        %v1261 = vpop.f32.mrf.mxu0
        %v1262 = vadd.f32 %v1178, %v1261
        %v1263 = vpop.f32.mrf.mxu0
        %v1264 = vpop.f32.mrf.mxu0
        %v1265 = vpop.f32.mrf.mxu0
        %1266 = vdwg.mxu0
        %vm1267 = vcmp.ge.f32.partialorder %v1262, 0.0
        %v1268 = vmul.f32 %v1262, 0.01
        %v1269 = vsel %vm1267, %v1262, %v1268
        %v1270 = vadd.f32 %v1269, %v596
        %v1271 = vpack.c.bf16 %v1270, %v1270
        %s1272 = scalar_lea.vmem [#allocation8], 320
        %v1273 = vld [vmem:[%s1272] sm:$0xf]
        %v1274 = vld [vmem:[%s1272 + $0x4] sm:$0xf]
        %v1275 = vld [vmem:[%s1272 + $0x8] sm:$0xf]
        %v1276 = vld [vmem:[%s1272 + $0xc] sm:$0xf]
        %v1277 = vld [vmem:[%s1272 + $0x10] sm:$0xf]
        %v1278 = vld [vmem:[%s1272 + $0x14] sm:$0xf]
        %v1279 = vld [vmem:[%s1272 + $0x18] sm:$0xf]
        %v1280 = vld [vmem:[%s1272 + $0x1c] sm:$0xf]
        %v1281 = vld [vmem:[%s1272 + $0x20] sm:$0xf]
        %v1282 = vld [vmem:[%s1272 + $0x24] sm:$0xf]
        %v1283 = vld [vmem:[%s1272 + $0x28] sm:$0xf]
        %v1284 = vld [vmem:[%s1272 + $0x2c] sm:$0xf]
        %v1285 = vld [vmem:[%s1272 + $0x30] sm:$0xf]
        %v1286 = vld [vmem:[%s1272 + $0x34] sm:$0xf]
        %v1287 = vld [vmem:[%s1272 + $0x38] sm:$0xf]
        %v1288 = vld [vmem:[%s1272 + $0x3c] sm:$0xf]
        %v1289 = vlaneseq
        %v1290 = vshrl.u32 %v1289, 7
        %v1291 = vsub.s32 5, %v1290
        %v1292 = vrot.slane %v1174, %v1291
        %v1309 = vunpack.c.l.b16 %v1273
        %v1310 = vunpack.c.l.b16 %v1274
        %v1311 = vunpack.c.l.b16 %v1275
        %v1312 = vunpack.c.l.b16 %v1276
        %v1313 = vunpack.c.l.b16 %v1277
        %v1314 = vunpack.c.l.b16 %v1278
        %v1315 = vunpack.c.l.b16 %v1279
        %v1316 = vunpack.c.l.b16 %v1280
        %v1317 = vunpack.c.l.b16 %v1281
        %v1318 = vunpack.c.l.b16 %v1282
        %v1319 = vunpack.c.l.b16 %v1283
        %v1320 = vunpack.c.l.b16 %v1284
        %v1321 = vunpack.c.l.b16 %v1285
        %v1322 = vunpack.c.l.b16 %v1286
        %v1323 = vunpack.c.l.b16 %v1287
        %v1324 = vunpack.c.l.b16 %v1288
        %v1325 = vpack.c.b16 %v1310, %v1309
        %v1326 = vpack.c.b16 %v1312, %v1311
        %v1327 = vpack.c.b16 %v1314, %v1313
        %v1328 = vpack.c.b16 %v1316, %v1315
        %v1329 = vpack.c.b16 %v1318, %v1317
        %v1330 = vpack.c.b16 %v1320, %v1319
        %v1331 = vpack.c.b16 %v1322, %v1321
        %v1332 = vpack.c.b16 %v1324, %v1323
        %1341 = vmatprep.subr.bf16.mxu0 0
        %1342 = vmatpush1.bf16.msra.mxu0 %v1332
        %1343 = vmatprep.subr.bf16.mxu0 0
        %1344 = vmatpush1.bf16.msra.mxu0 %v1331
        %1345 = vmatprep.subr.bf16.mxu0 0
        %1346 = vmatpush1.bf16.msra.mxu0 %v1330
        %1347 = vmatprep.subr.bf16.mxu0 0
        %1348 = vmatpush1.bf16.msra.mxu0 %v1329
        %1349 = vmatprep.subr.bf16.mxu0 0
        %1350 = vmatpush1.bf16.msra.mxu0 %v1328
        %1351 = vmatprep.subr.bf16.mxu0 0
        %1352 = vmatpush1.bf16.msra.mxu0 %v1327
        %1353 = vmatprep.subr.bf16.mxu0 0
        %1354 = vmatpush1.bf16.msra.mxu0 %v1326
        %1355 = vmatprep.subr.bf16.mxu0 0
        %1356 = vmatpush1.bf16.msra.mxu0 %v1325
        %1357 = vmatprep.subr.bf16.mxu0 0
        %1358 = vmatpush2.bf16.msra.mxu0 0
        %1359 = vmatprep.subr.bf16.mxu0 0
        %1360 = vmatpush2.bf16.msra.mxu0 0
        %1361 = vmatprep.subr.bf16.mxu0 0
        %1362 = vmatpush2.bf16.msra.mxu0 0
        %1363 = vmatprep.subr.bf16.mxu0 0
        %1364 = vmatpush2.bf16.msra.mxu0 0
        %1365 = vmatprep.subr.bf16.mxu0 0
        %1366 = vmatpush2.bf16.msra.mxu0 0
        %1367 = vmatprep.subr.bf16.mxu0 0
        %1368 = vmatpush2.bf16.msra.mxu0 0
        %1369 = vmatprep.subr.bf16.mxu0 0
        %1370 = vmatpush2.bf16.msra.mxu0 0
        %1371 = vmatprep.subr.bf16.mxu0 0
        %1372 = vmatpush2.bf16.msra.mxu0 0
        %1373 = vmatprep.mubr.bf16.mxu0 0
        %1374 = vmatmul.mubr.bf16.gmra.mxu0 %v1271
        %v1375 = vpop.f32.mrf.mxu0
        %v1376 = vadd.f32 %v1292, %v1375
        %v1377 = vpop.f32.mrf.mxu0
        %v1378 = vpop.f32.mrf.mxu0
        %v1379 = vpop.f32.mrf.mxu0
        %1380 = vdwg.mxu0
        %vm1381 = vcmp.ge.f32.partialorder %v1376, 0.0
        %v1382 = vmul.f32 %v1376, 0.01
        %v1383 = vsel %vm1381, %v1376, %v1382
        %v1384 = vpack.c.bf16 %v1383, %v1383
        %s1385 = scalar_lea.vmem [#allocation8], 384
        %v1386 = vld [vmem:[%s1385] sm:$0xf]
        %v1387 = vld [vmem:[%s1385 + $0x4] sm:$0xf]
        %v1388 = vld [vmem:[%s1385 + $0x8] sm:$0xf]
        %v1389 = vld [vmem:[%s1385 + $0xc] sm:$0xf]
        %v1390 = vld [vmem:[%s1385 + $0x10] sm:$0xf]
        %v1391 = vld [vmem:[%s1385 + $0x14] sm:$0xf]
        %v1392 = vld [vmem:[%s1385 + $0x18] sm:$0xf]
        %v1393 = vld [vmem:[%s1385 + $0x1c] sm:$0xf]
        %v1394 = vld [vmem:[%s1385 + $0x20] sm:$0xf]
        %v1395 = vld [vmem:[%s1385 + $0x24] sm:$0xf]
        %v1396 = vld [vmem:[%s1385 + $0x28] sm:$0xf]
        %v1397 = vld [vmem:[%s1385 + $0x2c] sm:$0xf]
        %v1398 = vld [vmem:[%s1385 + $0x30] sm:$0xf]
        %v1399 = vld [vmem:[%s1385 + $0x34] sm:$0xf]
        %v1400 = vld [vmem:[%s1385 + $0x38] sm:$0xf]
        %v1401 = vld [vmem:[%s1385 + $0x3c] sm:$0xf]
        %v1402 = vld [vmem:[#allocation9] sm:$0x8]
        %v1403 = vunpack.c.l.bf16 %v1402
        %v1404 = vlaneseq
        %v1405 = vshrl.u32 %v1404, 7
        %v1406 = vsub.s32 6, %v1405
        %v1407 = vrot.slane %v1403, %v1406
        %v1424 = vunpack.c.l.b16 %v1386
        %v1425 = vunpack.c.l.b16 %v1387
        %v1426 = vunpack.c.l.b16 %v1388
        %v1427 = vunpack.c.l.b16 %v1389
        %v1428 = vunpack.c.l.b16 %v1390
        %v1429 = vunpack.c.l.b16 %v1391
        %v1430 = vunpack.c.l.b16 %v1392
        %v1431 = vunpack.c.l.b16 %v1393
        %v1432 = vunpack.c.l.b16 %v1394
        %v1433 = vunpack.c.l.b16 %v1395
        %v1434 = vunpack.c.l.b16 %v1396
        %v1435 = vunpack.c.l.b16 %v1397
        %v1436 = vunpack.c.l.b16 %v1398
        %v1437 = vunpack.c.l.b16 %v1399
        %v1438 = vunpack.c.l.b16 %v1400
        %v1439 = vunpack.c.l.b16 %v1401
        %v1440 = vpack.c.b16 %v1425, %v1424
        %v1441 = vpack.c.b16 %v1427, %v1426
        %v1442 = vpack.c.b16 %v1429, %v1428
        %v1443 = vpack.c.b16 %v1431, %v1430
        %v1444 = vpack.c.b16 %v1433, %v1432
        %v1445 = vpack.c.b16 %v1435, %v1434
        %v1446 = vpack.c.b16 %v1437, %v1436
        %v1447 = vpack.c.b16 %v1439, %v1438
        %1456 = vmatprep.subr.bf16.mxu0 0
        %1457 = vmatpush1.bf16.msra.mxu0 %v1447
        %1458 = vmatprep.subr.bf16.mxu0 0
        %1459 = vmatpush1.bf16.msra.mxu0 %v1446
        %1460 = vmatprep.subr.bf16.mxu0 0
        %1461 = vmatpush1.bf16.msra.mxu0 %v1445
        %1462 = vmatprep.subr.bf16.mxu0 0
        %1463 = vmatpush1.bf16.msra.mxu0 %v1444
        %1464 = vmatprep.subr.bf16.mxu0 0
        %1465 = vmatpush1.bf16.msra.mxu0 %v1443
        %1466 = vmatprep.subr.bf16.mxu0 0
        %1467 = vmatpush1.bf16.msra.mxu0 %v1442
        %1468 = vmatprep.subr.bf16.mxu0 0
        %1469 = vmatpush1.bf16.msra.mxu0 %v1441
        %1470 = vmatprep.subr.bf16.mxu0 0
        %1471 = vmatpush1.bf16.msra.mxu0 %v1440
        %1472 = vmatprep.subr.bf16.mxu0 0
        %1473 = vmatpush2.bf16.msra.mxu0 0
        %1474 = vmatprep.subr.bf16.mxu0 0
        %1475 = vmatpush2.bf16.msra.mxu0 0
        %1476 = vmatprep.subr.bf16.mxu0 0
        %1477 = vmatpush2.bf16.msra.mxu0 0
        %1478 = vmatprep.subr.bf16.mxu0 0
        %1479 = vmatpush2.bf16.msra.mxu0 0
        %1480 = vmatprep.subr.bf16.mxu0 0
        %1481 = vmatpush2.bf16.msra.mxu0 0
        %1482 = vmatprep.subr.bf16.mxu0 0
        %1483 = vmatpush2.bf16.msra.mxu0 0
        %1484 = vmatprep.subr.bf16.mxu0 0
        %1485 = vmatpush2.bf16.msra.mxu0 0
        %1486 = vmatprep.subr.bf16.mxu0 0
        %1487 = vmatpush2.bf16.msra.mxu0 0
        %1488 = vmatprep.mubr.bf16.mxu0 0
        %1489 = vmatmul.mubr.bf16.gmra.mxu0 %v1384
        %v1490 = vpop.f32.mrf.mxu0
        %v1491 = vadd.f32 %v1407, %v1490
        %v1492 = vpop.f32.mrf.mxu0
        %v1493 = vpop.f32.mrf.mxu0
        %v1494 = vpop.f32.mrf.mxu0
        %1495 = vdwg.mxu0
        %vm1496 = vcmp.ge.f32.partialorder %v1491, 0.0
        %v1497 = vmul.f32 %v1491, 0.01
        %v1498 = vsel %vm1496, %v1491, %v1497
        %v1499 = vpack.c.bf16 %v1498, %v1498
        %v1501 = vsel %vm835, %v1499, 0
        %1503 = vmatprep.subr.bf16.mxu0 0
        %1504 = vmatpush1.bf16.msra.mxu0 0
        %1505 = vmatprep.subr.bf16.mxu0 0
        %1506 = vmatpush1.bf16.msra.mxu0 0
        %1507 = vmatprep.subr.bf16.mxu0 0
        %1508 = vmatpush1.bf16.msra.mxu0 0
        %1509 = vmatprep.subr.bf16.mxu0 0
        %1510 = vmatpush1.bf16.msra.mxu0 0
        %1511 = vmatprep.subr.bf16.mxu0 0
        %1512 = vmatpush1.bf16.msra.mxu0 0
        %1513 = vmatprep.subr.bf16.mxu0 0
        %1514 = vmatpush1.bf16.msra.mxu0 0
        %1515 = vmatprep.subr.bf16.mxu0 0
        %1516 = vmatpush1.bf16.msra.mxu0 0
        %1517 = vmatprep.subr.bf16.mxu0 0
        %1518 = vmatpush1.bf16.msra.mxu0 %v1501
        %1519 = vmatprep.subr.bf16.mxu0 0
        %1520 = vmatpush2.bf16.msra.mxu0 0
        %1521 = vmatprep.subr.bf16.mxu0 0
        %1522 = vmatpush2.bf16.msra.mxu0 0
        %1523 = vmatprep.subr.bf16.mxu0 0
        %1524 = vmatpush2.bf16.msra.mxu0 0
        %1525 = vmatprep.subr.bf16.mxu0 0
        %1526 = vmatpush2.bf16.msra.mxu0 0
        %1527 = vmatprep.subr.bf16.mxu0 0
        %1528 = vmatpush2.bf16.msra.mxu0 0
        %1529 = vmatprep.subr.bf16.mxu0 0
        %1530 = vmatpush2.bf16.msra.mxu0 0
        %1531 = vmatprep.subr.bf16.mxu0 0
        %1532 = vmatpush2.bf16.msra.mxu0 0
        %1533 = vmatprep.subr.bf16.mxu0 0
        %1534 = vmatpush2.bf16.msra.mxu0 0
        %1535 = vmatprep.mubr.bf16.mxu0 0
        %1536 = vmatmul.mubr.bf16.gmra.mxu0 %v833
        %v1537 = vpop.f32.mrf.mxu0
        %v1538 = vadd.f32 0.0, %v1537
        %v1539 = vpop.f32.mrf.mxu0
        %v1540 = vpop.f32.mrf.mxu0
        %v1541 = vpop.f32.mrf.mxu0
        %1542 = vdwg.mxu0
        %v1543 = vpack.c.bf16 %v1538, %v1538
        %s1544 = scalar_lea.vmem [#allocation8], 448
        %v1545 = vld [vmem:[%s1544] sm:$0xf]
        %v1546 = vld [vmem:[%s1544 + $0x4] sm:$0xf]
        %v1547 = vld [vmem:[%s1544 + $0x8] sm:$0xf]
        %v1548 = vld [vmem:[%s1544 + $0xc] sm:$0xf]
        %v1549 = vld [vmem:[%s1544 + $0x10] sm:$0xf]
        %v1550 = vld [vmem:[%s1544 + $0x14] sm:$0xf]
        %v1551 = vld [vmem:[%s1544 + $0x18] sm:$0xf]
        %v1552 = vld [vmem:[%s1544 + $0x1c] sm:$0xf]
        %v1553 = vld [vmem:[%s1544 + $0x20] sm:$0xf]
        %v1554 = vld [vmem:[%s1544 + $0x24] sm:$0xf]
        %v1555 = vld [vmem:[%s1544 + $0x28] sm:$0xf]
        %v1556 = vld [vmem:[%s1544 + $0x2c] sm:$0xf]
        %v1557 = vld [vmem:[%s1544 + $0x30] sm:$0xf]
        %v1558 = vld [vmem:[%s1544 + $0x34] sm:$0xf]
        %v1559 = vld [vmem:[%s1544 + $0x38] sm:$0xf]
        %v1560 = vld [vmem:[%s1544 + $0x3c] sm:$0xf]
        %v1561 = vlaneseq
        %v1562 = vshrl.u32 %v1561, 7
        %v1563 = vsub.s32 7, %v1562
        %v1564 = vrot.slane %v1403, %v1563
        %v1581 = vunpack.c.l.b16 %v1545
        %v1582 = vunpack.c.l.b16 %v1546
        %v1583 = vunpack.c.l.b16 %v1547
        %v1584 = vunpack.c.l.b16 %v1548
        %v1585 = vunpack.c.l.b16 %v1549
        %v1586 = vunpack.c.l.b16 %v1550
        %v1587 = vunpack.c.l.b16 %v1551
        %v1588 = vunpack.c.l.b16 %v1552
        %v1589 = vunpack.c.l.b16 %v1553
        %v1590 = vunpack.c.l.b16 %v1554
        %v1591 = vunpack.c.l.b16 %v1555
        %v1592 = vunpack.c.l.b16 %v1556
        %v1593 = vunpack.c.l.b16 %v1557
        %v1594 = vunpack.c.l.b16 %v1558
        %v1595 = vunpack.c.l.b16 %v1559
        %v1596 = vunpack.c.l.b16 %v1560
        %v1597 = vpack.c.b16 %v1582, %v1581
        %v1598 = vpack.c.b16 %v1584, %v1583
        %v1599 = vpack.c.b16 %v1586, %v1585
        %v1600 = vpack.c.b16 %v1588, %v1587
        %v1601 = vpack.c.b16 %v1590, %v1589
        %v1602 = vpack.c.b16 %v1592, %v1591
        %v1603 = vpack.c.b16 %v1594, %v1593
        %v1604 = vpack.c.b16 %v1596, %v1595
        %1613 = vmatprep.subr.bf16.mxu0 0
        %1614 = vmatpush1.bf16.msra.mxu0 %v1604
        %1615 = vmatprep.subr.bf16.mxu0 0
        %1616 = vmatpush1.bf16.msra.mxu0 %v1603
        %1617 = vmatprep.subr.bf16.mxu0 0
        %1618 = vmatpush1.bf16.msra.mxu0 %v1602
        %1619 = vmatprep.subr.bf16.mxu0 0
        %1620 = vmatpush1.bf16.msra.mxu0 %v1601
        %1621 = vmatprep.subr.bf16.mxu0 0
        %1622 = vmatpush1.bf16.msra.mxu0 %v1600
        %1623 = vmatprep.subr.bf16.mxu0 0
        %1624 = vmatpush1.bf16.msra.mxu0 %v1599
        %1625 = vmatprep.subr.bf16.mxu0 0
        %1626 = vmatpush1.bf16.msra.mxu0 %v1598
        %1627 = vmatprep.subr.bf16.mxu0 0
        %1628 = vmatpush1.bf16.msra.mxu0 %v1597
        %1629 = vmatprep.subr.bf16.mxu0 0
        %1630 = vmatpush2.bf16.msra.mxu0 0
        %1631 = vmatprep.subr.bf16.mxu0 0
        %1632 = vmatpush2.bf16.msra.mxu0 0
        %1633 = vmatprep.subr.bf16.mxu0 0
        %1634 = vmatpush2.bf16.msra.mxu0 0
        %1635 = vmatprep.subr.bf16.mxu0 0
        %1636 = vmatpush2.bf16.msra.mxu0 0
        %1637 = vmatprep.subr.bf16.mxu0 0
        %1638 = vmatpush2.bf16.msra.mxu0 0
        %1639 = vmatprep.subr.bf16.mxu0 0
        %1640 = vmatpush2.bf16.msra.mxu0 0
        %1641 = vmatprep.subr.bf16.mxu0 0
        %1642 = vmatpush2.bf16.msra.mxu0 0
        %1643 = vmatprep.subr.bf16.mxu0 0
        %1644 = vmatpush2.bf16.msra.mxu0 0
        %1645 = vmatprep.mubr.bf16.mxu0 0
        %1646 = vmatmul.mubr.bf16.gmra.mxu0 %v1543
        %v1647 = vpop.f32.mrf.mxu0
        %v1648 = vadd.f32 %v1564, %v1647
        %v1649 = vpop.f32.mrf.mxu0
        %v1650 = vpop.f32.mrf.mxu0
        %v1651 = vpop.f32.mrf.mxu0
        %1652 = vdwg.mxu0
        %vm1653 = vcmp.ge.f32.partialorder %v1648, 0.0
        %v1654 = vmul.f32 %v1648, 0.01
        %v1655 = vsel %vm1653, %v1648, %v1654
        %v1656 = vpack.c.bf16 %v1655, %v1655
        %s1657 = scalar_lea.vmem [#allocation8], 512
        %v1658 = vld [vmem:[%s1657] sm:$0xf]
        %v1659 = vld [vmem:[%s1657 + $0x4] sm:$0xf]
        %v1660 = vld [vmem:[%s1657 + $0x8] sm:$0xf]
        %v1661 = vld [vmem:[%s1657 + $0xc] sm:$0xf]
        %v1662 = vld [vmem:[%s1657 + $0x10] sm:$0xf]
        %v1663 = vld [vmem:[%s1657 + $0x14] sm:$0xf]
        %v1664 = vld [vmem:[%s1657 + $0x18] sm:$0xf]
        %v1665 = vld [vmem:[%s1657 + $0x1c] sm:$0xf]
        %v1666 = vld [vmem:[%s1657 + $0x20] sm:$0xf]
        %v1667 = vld [vmem:[%s1657 + $0x24] sm:$0xf]
        %v1668 = vld [vmem:[%s1657 + $0x28] sm:$0xf]
        %v1669 = vld [vmem:[%s1657 + $0x2c] sm:$0xf]
        %v1670 = vld [vmem:[%s1657 + $0x30] sm:$0xf]
        %v1671 = vld [vmem:[%s1657 + $0x34] sm:$0xf]
        %v1672 = vld [vmem:[%s1657 + $0x38] sm:$0xf]
        %v1673 = vld [vmem:[%s1657 + $0x3c] sm:$0xf]
        %v1674 = vld [vmem:[#allocation9 + $0x4] sm:$0x1]
        %v1675 = vunpack.c.l.bf16 %v1674
        %v1676 = vlaneseq
        %v1677 = vshrl.u32 %v1676, 7
        %v1678 = vsub.s32 0, %v1677
        %v1679 = vrot.slane %v1675, %v1678
        %v1696 = vunpack.c.l.b16 %v1658
        %v1697 = vunpack.c.l.b16 %v1659
        %v1698 = vunpack.c.l.b16 %v1660
        %v1699 = vunpack.c.l.b16 %v1661
        %v1700 = vunpack.c.l.b16 %v1662
        %v1701 = vunpack.c.l.b16 %v1663
        %v1702 = vunpack.c.l.b16 %v1664
        %v1703 = vunpack.c.l.b16 %v1665
        %v1704 = vunpack.c.l.b16 %v1666
        %v1705 = vunpack.c.l.b16 %v1667
        %v1706 = vunpack.c.l.b16 %v1668
        %v1707 = vunpack.c.l.b16 %v1669
        %v1708 = vunpack.c.l.b16 %v1670
        %v1709 = vunpack.c.l.b16 %v1671
        %v1710 = vunpack.c.l.b16 %v1672
        %v1711 = vunpack.c.l.b16 %v1673
        %v1712 = vpack.c.b16 %v1697, %v1696
        %v1713 = vpack.c.b16 %v1699, %v1698
        %v1714 = vpack.c.b16 %v1701, %v1700
        %v1715 = vpack.c.b16 %v1703, %v1702
        %v1716 = vpack.c.b16 %v1705, %v1704
        %v1717 = vpack.c.b16 %v1707, %v1706
        %v1718 = vpack.c.b16 %v1709, %v1708
        %v1719 = vpack.c.b16 %v1711, %v1710
        %1728 = vmatprep.subr.bf16.mxu0 0
        %1729 = vmatpush1.bf16.msra.mxu0 %v1719
        %1730 = vmatprep.subr.bf16.mxu0 0
        %1731 = vmatpush1.bf16.msra.mxu0 %v1718
        %1732 = vmatprep.subr.bf16.mxu0 0
        %1733 = vmatpush1.bf16.msra.mxu0 %v1717
        %1734 = vmatprep.subr.bf16.mxu0 0
        %1735 = vmatpush1.bf16.msra.mxu0 %v1716
        %1736 = vmatprep.subr.bf16.mxu0 0
        %1737 = vmatpush1.bf16.msra.mxu0 %v1715
        %1738 = vmatprep.subr.bf16.mxu0 0
        %1739 = vmatpush1.bf16.msra.mxu0 %v1714
        %1740 = vmatprep.subr.bf16.mxu0 0
        %1741 = vmatpush1.bf16.msra.mxu0 %v1713
        %1742 = vmatprep.subr.bf16.mxu0 0
        %1743 = vmatpush1.bf16.msra.mxu0 %v1712
        %1744 = vmatprep.subr.bf16.mxu0 0
        %1745 = vmatpush2.bf16.msra.mxu0 0
        %1746 = vmatprep.subr.bf16.mxu0 0
        %1747 = vmatpush2.bf16.msra.mxu0 0
        %1748 = vmatprep.subr.bf16.mxu0 0
        %1749 = vmatpush2.bf16.msra.mxu0 0
        %1750 = vmatprep.subr.bf16.mxu0 0
        %1751 = vmatpush2.bf16.msra.mxu0 0
        %1752 = vmatprep.subr.bf16.mxu0 0
        %1753 = vmatpush2.bf16.msra.mxu0 0
        %1754 = vmatprep.subr.bf16.mxu0 0
        %1755 = vmatpush2.bf16.msra.mxu0 0
        %1756 = vmatprep.subr.bf16.mxu0 0
        %1757 = vmatpush2.bf16.msra.mxu0 0
        %1758 = vmatprep.subr.bf16.mxu0 0
        %1759 = vmatpush2.bf16.msra.mxu0 0
        %1760 = vmatprep.mubr.bf16.mxu0 0
        %1761 = vmatmul.mubr.bf16.gmra.mxu0 %v1656
        %v1762 = vpop.f32.mrf.mxu0
        %v1763 = vadd.f32 %v1679, %v1762
        %v1764 = vpop.f32.mrf.mxu0
        %v1765 = vpop.f32.mrf.mxu0
        %v1766 = vpop.f32.mrf.mxu0
        %1767 = vdwg.mxu0
        %vm1768 = vcmp.ge.f32.partialorder %v1763, 0.0
        %v1769 = vmul.f32 %v1763, 0.01
        %v1770 = vsel %vm1768, %v1763, %v1769
        %v1771 = vpack.c.bf16 %v1770, %v1770
        %v1773 = vsel %vm835, %v1771, 0
        %1775 = vmatprep.subr.bf16.mxu0 0
        %1776 = vmatpush1.bf16.msra.mxu0 0
        %1777 = vmatprep.subr.bf16.mxu0 0
        %1778 = vmatpush1.bf16.msra.mxu0 0
        %1779 = vmatprep.subr.bf16.mxu0 0
        %1780 = vmatpush1.bf16.msra.mxu0 0
        %1781 = vmatprep.subr.bf16.mxu0 0
        %1782 = vmatpush1.bf16.msra.mxu0 0
        %1783 = vmatprep.subr.bf16.mxu0 0
        %1784 = vmatpush1.bf16.msra.mxu0 0
        %1785 = vmatprep.subr.bf16.mxu0 0
        %1786 = vmatpush1.bf16.msra.mxu0 0
        %1787 = vmatprep.subr.bf16.mxu0 0
        %1788 = vmatpush1.bf16.msra.mxu0 0
        %1789 = vmatprep.subr.bf16.mxu0 0
        %1790 = vmatpush1.bf16.msra.mxu0 %v1773
        %1791 = vmatprep.subr.bf16.mxu0 0
        %1792 = vmatpush2.bf16.msra.mxu0 0
        %1793 = vmatprep.subr.bf16.mxu0 0
        %1794 = vmatpush2.bf16.msra.mxu0 0
        %1795 = vmatprep.subr.bf16.mxu0 0
        %1796 = vmatpush2.bf16.msra.mxu0 0
        %1797 = vmatprep.subr.bf16.mxu0 0
        %1798 = vmatpush2.bf16.msra.mxu0 0
        %1799 = vmatprep.subr.bf16.mxu0 0
        %1800 = vmatpush2.bf16.msra.mxu0 0
        %1801 = vmatprep.subr.bf16.mxu0 0
        %1802 = vmatpush2.bf16.msra.mxu0 0
        %1803 = vmatprep.subr.bf16.mxu0 0
        %1804 = vmatpush2.bf16.msra.mxu0 0
        %1805 = vmatprep.subr.bf16.mxu0 0
        %1806 = vmatpush2.bf16.msra.mxu0 0
        %1807 = vmatprep.mubr.bf16.mxu0 0
        %1808 = vmatmul.mubr.bf16.gmra.mxu0 %v1109
        %v1809 = vpop.f32.mrf.mxu0
        %v1810 = vadd.f32 0.0, %v1809
        %v1811 = vpop.f32.mrf.mxu0
        %v1812 = vpop.f32.mrf.mxu0
        %v1813 = vpop.f32.mrf.mxu0
        %1814 = vdwg.mxu0
        %v1815 = vadd.f32 %v1498, %v1810
        %v1816 = vpack.c.bf16 %v1815, %v1815
        %s1817 = scalar_lea.vmem [#allocation8], 576
        %v1818 = vld [vmem:[%s1817] sm:$0xf]
        %v1819 = vld [vmem:[%s1817 + $0x4] sm:$0xf]
        %v1820 = vld [vmem:[%s1817 + $0x8] sm:$0xf]
        %v1821 = vld [vmem:[%s1817 + $0xc] sm:$0xf]
        %v1822 = vld [vmem:[%s1817 + $0x10] sm:$0xf]
        %v1823 = vld [vmem:[%s1817 + $0x14] sm:$0xf]
        %v1824 = vld [vmem:[%s1817 + $0x18] sm:$0xf]
        %v1825 = vld [vmem:[%s1817 + $0x1c] sm:$0xf]
        %v1826 = vld [vmem:[%s1817 + $0x20] sm:$0xf]
        %v1827 = vld [vmem:[%s1817 + $0x24] sm:$0xf]
        %v1828 = vld [vmem:[%s1817 + $0x28] sm:$0xf]
        %v1829 = vld [vmem:[%s1817 + $0x2c] sm:$0xf]
        %v1830 = vld [vmem:[%s1817 + $0x30] sm:$0xf]
        %v1831 = vld [vmem:[%s1817 + $0x34] sm:$0xf]
        %v1832 = vld [vmem:[%s1817 + $0x38] sm:$0xf]
        %v1833 = vld [vmem:[%s1817 + $0x3c] sm:$0xf]
        %v1834 = vlaneseq
        %v1835 = vshrl.u32 %v1834, 7
        %v1836 = vsub.s32 1, %v1835
        %v1837 = vrot.slane %v1675, %v1836
        %v1854 = vunpack.c.l.b16 %v1818
        %v1855 = vunpack.c.l.b16 %v1819
        %v1856 = vunpack.c.l.b16 %v1820
        %v1857 = vunpack.c.l.b16 %v1821
        %v1858 = vunpack.c.l.b16 %v1822
        %v1859 = vunpack.c.l.b16 %v1823
        %v1860 = vunpack.c.l.b16 %v1824
        %v1861 = vunpack.c.l.b16 %v1825
        %v1862 = vunpack.c.l.b16 %v1826
        %v1863 = vunpack.c.l.b16 %v1827
        %v1864 = vunpack.c.l.b16 %v1828
        %v1865 = vunpack.c.l.b16 %v1829
        %v1866 = vunpack.c.l.b16 %v1830
        %v1867 = vunpack.c.l.b16 %v1831
        %v1868 = vunpack.c.l.b16 %v1832
        %v1869 = vunpack.c.l.b16 %v1833
        %v1870 = vpack.c.b16 %v1855, %v1854
        %v1871 = vpack.c.b16 %v1857, %v1856
        %v1872 = vpack.c.b16 %v1859, %v1858
        %v1873 = vpack.c.b16 %v1861, %v1860
        %v1874 = vpack.c.b16 %v1863, %v1862
        %v1875 = vpack.c.b16 %v1865, %v1864
        %v1876 = vpack.c.b16 %v1867, %v1866
        %v1877 = vpack.c.b16 %v1869, %v1868
        %1886 = vmatprep.subr.bf16.mxu0 0
        %1887 = vmatpush1.bf16.msra.mxu0 %v1877
        %1888 = vmatprep.subr.bf16.mxu0 0
        %1889 = vmatpush1.bf16.msra.mxu0 %v1876
        %1890 = vmatprep.subr.bf16.mxu0 0
        %1891 = vmatpush1.bf16.msra.mxu0 %v1875
        %1892 = vmatprep.subr.bf16.mxu0 0
        %1893 = vmatpush1.bf16.msra.mxu0 %v1874
        %1894 = vmatprep.subr.bf16.mxu0 0
        %1895 = vmatpush1.bf16.msra.mxu0 %v1873
        %1896 = vmatprep.subr.bf16.mxu0 0
        %1897 = vmatpush1.bf16.msra.mxu0 %v1872
        %1898 = vmatprep.subr.bf16.mxu0 0
        %1899 = vmatpush1.bf16.msra.mxu0 %v1871
        %1900 = vmatprep.subr.bf16.mxu0 0
        %1901 = vmatpush1.bf16.msra.mxu0 %v1870
        %1902 = vmatprep.subr.bf16.mxu0 0
        %1903 = vmatpush2.bf16.msra.mxu0 0
        %1904 = vmatprep.subr.bf16.mxu0 0
        %1905 = vmatpush2.bf16.msra.mxu0 0
        %1906 = vmatprep.subr.bf16.mxu0 0
        %1907 = vmatpush2.bf16.msra.mxu0 0
        %1908 = vmatprep.subr.bf16.mxu0 0
        %1909 = vmatpush2.bf16.msra.mxu0 0
        %1910 = vmatprep.subr.bf16.mxu0 0
        %1911 = vmatpush2.bf16.msra.mxu0 0
        %1912 = vmatprep.subr.bf16.mxu0 0
        %1913 = vmatpush2.bf16.msra.mxu0 0
        %1914 = vmatprep.subr.bf16.mxu0 0
        %1915 = vmatpush2.bf16.msra.mxu0 0
        %1916 = vmatprep.subr.bf16.mxu0 0
        %1917 = vmatpush2.bf16.msra.mxu0 0
        %1918 = vmatprep.mubr.bf16.mxu0 0
        %1919 = vmatmul.mubr.bf16.gmra.mxu0 %v1816
        %v1920 = vpop.f32.mrf.mxu0
        %v1921 = vadd.f32 %v1837, %v1920
        %v1922 = vpop.f32.mrf.mxu0
        %v1923 = vpop.f32.mrf.mxu0
        %v1924 = vpop.f32.mrf.mxu0
        %1925 = vdwg.mxu0
        %vm1926 = vcmp.ge.f32.partialorder %v1921, 0.0
        %v1927 = vmul.f32 %v1921, 0.01
        %v1928 = vsel %vm1926, %v1921, %v1927
        %v1929 = vadd.f32 %v1928, %v1270
        %v1930 = vpack.c.bf16 %v1929, %v1929
        %v1932 = vsel %vm835, %v1930, 0
        %1934 = vmatprep.subr.bf16.mxu0 0
        %1935 = vmatpush1.bf16.msra.mxu0 0
        %1936 = vmatprep.subr.bf16.mxu0 0
        %1937 = vmatpush1.bf16.msra.mxu0 0
        %1938 = vmatprep.subr.bf16.mxu0 0
        %1939 = vmatpush1.bf16.msra.mxu0 0
        %1940 = vmatprep.subr.bf16.mxu0 0
        %1941 = vmatpush1.bf16.msra.mxu0 0
        %1942 = vmatprep.subr.bf16.mxu0 0
        %1943 = vmatpush1.bf16.msra.mxu0 0
        %1944 = vmatprep.subr.bf16.mxu0 0
        %1945 = vmatpush1.bf16.msra.mxu0 0
        %1946 = vmatprep.subr.bf16.mxu0 0
        %1947 = vmatpush1.bf16.msra.mxu0 0
        %1948 = vmatprep.subr.bf16.mxu0 0
        %1949 = vmatpush1.bf16.msra.mxu0 %v1932
        %1950 = vmatprep.subr.bf16.mxu0 0
        %1951 = vmatpush2.bf16.msra.mxu0 0
        %1952 = vmatprep.subr.bf16.mxu0 0
        %1953 = vmatpush2.bf16.msra.mxu0 0
        %1954 = vmatprep.subr.bf16.mxu0 0
        %1955 = vmatpush2.bf16.msra.mxu0 0
        %1956 = vmatprep.subr.bf16.mxu0 0
        %1957 = vmatpush2.bf16.msra.mxu0 0
        %1958 = vmatprep.subr.bf16.mxu0 0
        %1959 = vmatpush2.bf16.msra.mxu0 0
        %1960 = vmatprep.subr.bf16.mxu0 0
        %1961 = vmatpush2.bf16.msra.mxu0 0
        %1962 = vmatprep.subr.bf16.mxu0 0
        %1963 = vmatpush2.bf16.msra.mxu0 0
        %1964 = vmatprep.subr.bf16.mxu0 0
        %1965 = vmatpush2.bf16.msra.mxu0 0
        %1966 = vmatprep.mubr.bf16.mxu0 0
        %1967 = vmatmul.mubr.bf16.gmra.mxu0 %v833
        %v1968 = vpop.f32.mrf.mxu0
        %v1969 = vadd.f32 0.0, %v1968
        %v1970 = vpop.f32.mrf.mxu0
        %v1971 = vpop.f32.mrf.mxu0
        %v1972 = vpop.f32.mrf.mxu0
        %1973 = vdwg.mxu0
        %v1974 = vpack.c.bf16 %v1969, %v1969
        %s1975 = scalar_lea.vmem [#allocation8], 640
        %v1976 = vld [vmem:[%s1975] sm:$0xf]
        %v1977 = vld [vmem:[%s1975 + $0x4] sm:$0xf]
        %v1978 = vld [vmem:[%s1975 + $0x8] sm:$0xf]
        %v1979 = vld [vmem:[%s1975 + $0xc] sm:$0xf]
        %v1980 = vld [vmem:[%s1975 + $0x10] sm:$0xf]
        %v1981 = vld [vmem:[%s1975 + $0x14] sm:$0xf]
        %v1982 = vld [vmem:[%s1975 + $0x18] sm:$0xf]
        %v1983 = vld [vmem:[%s1975 + $0x1c] sm:$0xf]
        %v1984 = vld [vmem:[%s1975 + $0x20] sm:$0xf]
        %v1985 = vld [vmem:[%s1975 + $0x24] sm:$0xf]
        %v1986 = vld [vmem:[%s1975 + $0x28] sm:$0xf]
        %v1987 = vld [vmem:[%s1975 + $0x2c] sm:$0xf]
        %v1988 = vld [vmem:[%s1975 + $0x30] sm:$0xf]
        %v1989 = vld [vmem:[%s1975 + $0x34] sm:$0xf]
        %v1990 = vld [vmem:[%s1975 + $0x38] sm:$0xf]
        %v1991 = vld [vmem:[%s1975 + $0x3c] sm:$0xf]
        %v1992 = vld [vmem:[#allocation9 + $0x4] sm:$0x2]
        %v1993 = vunpack.c.l.bf16 %v1992
        %v1994 = vlaneseq
        %v1995 = vshrl.u32 %v1994, 7
        %v1996 = vsub.s32 2, %v1995
        %v1997 = vrot.slane %v1993, %v1996
        %v2014 = vunpack.c.l.b16 %v1976
        %v2015 = vunpack.c.l.b16 %v1977
        %v2016 = vunpack.c.l.b16 %v1978
        %v2017 = vunpack.c.l.b16 %v1979
        %v2018 = vunpack.c.l.b16 %v1980
        %v2019 = vunpack.c.l.b16 %v1981
        %v2020 = vunpack.c.l.b16 %v1982
        %v2021 = vunpack.c.l.b16 %v1983
        %v2022 = vunpack.c.l.b16 %v1984
        %v2023 = vunpack.c.l.b16 %v1985
        %v2024 = vunpack.c.l.b16 %v1986
        %v2025 = vunpack.c.l.b16 %v1987
        %v2026 = vunpack.c.l.b16 %v1988
        %v2027 = vunpack.c.l.b16 %v1989
        %v2028 = vunpack.c.l.b16 %v1990
        %v2029 = vunpack.c.l.b16 %v1991
        %v2030 = vpack.c.b16 %v2015, %v2014
        %v2031 = vpack.c.b16 %v2017, %v2016
        %v2032 = vpack.c.b16 %v2019, %v2018
        %v2033 = vpack.c.b16 %v2021, %v2020
        %v2034 = vpack.c.b16 %v2023, %v2022
        %v2035 = vpack.c.b16 %v2025, %v2024
        %v2036 = vpack.c.b16 %v2027, %v2026
        %v2037 = vpack.c.b16 %v2029, %v2028
        %2046 = vmatprep.subr.bf16.mxu0 0
        %2047 = vmatpush1.bf16.msra.mxu0 %v2037
        %2048 = vmatprep.subr.bf16.mxu0 0
        %2049 = vmatpush1.bf16.msra.mxu0 %v2036
        %2050 = vmatprep.subr.bf16.mxu0 0
        %2051 = vmatpush1.bf16.msra.mxu0 %v2035
        %2052 = vmatprep.subr.bf16.mxu0 0
        %2053 = vmatpush1.bf16.msra.mxu0 %v2034
        %2054 = vmatprep.subr.bf16.mxu0 0
        %2055 = vmatpush1.bf16.msra.mxu0 %v2033
        %2056 = vmatprep.subr.bf16.mxu0 0
        %2057 = vmatpush1.bf16.msra.mxu0 %v2032
        %2058 = vmatprep.subr.bf16.mxu0 0
        %2059 = vmatpush1.bf16.msra.mxu0 %v2031
        %2060 = vmatprep.subr.bf16.mxu0 0
        %2061 = vmatpush1.bf16.msra.mxu0 %v2030
        %2062 = vmatprep.subr.bf16.mxu0 0
        %2063 = vmatpush2.bf16.msra.mxu0 0
        %2064 = vmatprep.subr.bf16.mxu0 0
        %2065 = vmatpush2.bf16.msra.mxu0 0
        %2066 = vmatprep.subr.bf16.mxu0 0
        %2067 = vmatpush2.bf16.msra.mxu0 0
        %2068 = vmatprep.subr.bf16.mxu0 0
        %2069 = vmatpush2.bf16.msra.mxu0 0
        %2070 = vmatprep.subr.bf16.mxu0 0
        %2071 = vmatpush2.bf16.msra.mxu0 0
        %2072 = vmatprep.subr.bf16.mxu0 0
        %2073 = vmatpush2.bf16.msra.mxu0 0
        %2074 = vmatprep.subr.bf16.mxu0 0
        %2075 = vmatpush2.bf16.msra.mxu0 0
        %2076 = vmatprep.subr.bf16.mxu0 0
        %2077 = vmatpush2.bf16.msra.mxu0 0
        %2078 = vmatprep.mubr.bf16.mxu0 0
        %2079 = vmatmul.mubr.bf16.gmra.mxu0 %v1974
        %v2080 = vpop.f32.mrf.mxu0
        %v2081 = vadd.f32 %v1997, %v2080
        %v2082 = vpop.f32.mrf.mxu0
        %v2083 = vpop.f32.mrf.mxu0
        %v2084 = vpop.f32.mrf.mxu0
        %2085 = vdwg.mxu0
        %vm2086 = vcmp.ge.f32.partialorder %v2081, 0.0
        %v2087 = vmul.f32 %v2081, 0.01
        %v2088 = vsel %vm2086, %v2081, %v2087
        %v2089 = vpack.c.bf16 %v2088, %v2088
        %s2090 = scalar_lea.vmem [#allocation8], 704
        %v2091 = vld [vmem:[%s2090] sm:$0xf]
        %v2092 = vld [vmem:[%s2090 + $0x4] sm:$0xf]
        %v2093 = vld [vmem:[%s2090 + $0x8] sm:$0xf]
        %v2094 = vld [vmem:[%s2090 + $0xc] sm:$0xf]
        %v2095 = vld [vmem:[%s2090 + $0x10] sm:$0xf]
        %v2096 = vld [vmem:[%s2090 + $0x14] sm:$0xf]
        %v2097 = vld [vmem:[%s2090 + $0x18] sm:$0xf]
        %v2098 = vld [vmem:[%s2090 + $0x1c] sm:$0xf]
        %v2099 = vld [vmem:[%s2090 + $0x20] sm:$0xf]
        %v2100 = vld [vmem:[%s2090 + $0x24] sm:$0xf]
        %v2101 = vld [vmem:[%s2090 + $0x28] sm:$0xf]
        %v2102 = vld [vmem:[%s2090 + $0x2c] sm:$0xf]
        %v2103 = vld [vmem:[%s2090 + $0x30] sm:$0xf]
        %v2104 = vld [vmem:[%s2090 + $0x34] sm:$0xf]
        %v2105 = vld [vmem:[%s2090 + $0x38] sm:$0xf]
        %v2106 = vld [vmem:[%s2090 + $0x3c] sm:$0xf]
        %v2107 = vlaneseq
        %v2108 = vshrl.u32 %v2107, 7
        %v2109 = vsub.s32 3, %v2108
        %v2110 = vrot.slane %v1993, %v2109
        %v2127 = vunpack.c.l.b16 %v2091
        %v2128 = vunpack.c.l.b16 %v2092
        %v2129 = vunpack.c.l.b16 %v2093
        %v2130 = vunpack.c.l.b16 %v2094
        %v2131 = vunpack.c.l.b16 %v2095
        %v2132 = vunpack.c.l.b16 %v2096
        %v2133 = vunpack.c.l.b16 %v2097
        %v2134 = vunpack.c.l.b16 %v2098
        %v2135 = vunpack.c.l.b16 %v2099
        %v2136 = vunpack.c.l.b16 %v2100
        %v2137 = vunpack.c.l.b16 %v2101
        %v2138 = vunpack.c.l.b16 %v2102
        %v2139 = vunpack.c.l.b16 %v2103
        %v2140 = vunpack.c.l.b16 %v2104
        %v2141 = vunpack.c.l.b16 %v2105
        %v2142 = vunpack.c.l.b16 %v2106
        %v2143 = vpack.c.b16 %v2128, %v2127
        %v2144 = vpack.c.b16 %v2130, %v2129
        %v2145 = vpack.c.b16 %v2132, %v2131
        %v2146 = vpack.c.b16 %v2134, %v2133
        %v2147 = vpack.c.b16 %v2136, %v2135
        %v2148 = vpack.c.b16 %v2138, %v2137
        %v2149 = vpack.c.b16 %v2140, %v2139
        %v2150 = vpack.c.b16 %v2142, %v2141
        %2159 = vmatprep.subr.bf16.mxu0 0
        %2160 = vmatpush1.bf16.msra.mxu0 %v2150
        %2161 = vmatprep.subr.bf16.mxu0 0
        %2162 = vmatpush1.bf16.msra.mxu0 %v2149
        %2163 = vmatprep.subr.bf16.mxu0 0
        %2164 = vmatpush1.bf16.msra.mxu0 %v2148
        %2165 = vmatprep.subr.bf16.mxu0 0
        %2166 = vmatpush1.bf16.msra.mxu0 %v2147
        %2167 = vmatprep.subr.bf16.mxu0 0
        %2168 = vmatpush1.bf16.msra.mxu0 %v2146
        %2169 = vmatprep.subr.bf16.mxu0 0
        %2170 = vmatpush1.bf16.msra.mxu0 %v2145
        %2171 = vmatprep.subr.bf16.mxu0 0
        %2172 = vmatpush1.bf16.msra.mxu0 %v2144
        %2173 = vmatprep.subr.bf16.mxu0 0
        %2174 = vmatpush1.bf16.msra.mxu0 %v2143
        %2175 = vmatprep.subr.bf16.mxu0 0
        %2176 = vmatpush2.bf16.msra.mxu0 0
        %2177 = vmatprep.subr.bf16.mxu0 0
        %2178 = vmatpush2.bf16.msra.mxu0 0
        %2179 = vmatprep.subr.bf16.mxu0 0
        %2180 = vmatpush2.bf16.msra.mxu0 0
        %2181 = vmatprep.subr.bf16.mxu0 0
        %2182 = vmatpush2.bf16.msra.mxu0 0
        %2183 = vmatprep.subr.bf16.mxu0 0
        %2184 = vmatpush2.bf16.msra.mxu0 0
        %2185 = vmatprep.subr.bf16.mxu0 0
        %2186 = vmatpush2.bf16.msra.mxu0 0
        %2187 = vmatprep.subr.bf16.mxu0 0
        %2188 = vmatpush2.bf16.msra.mxu0 0
        %2189 = vmatprep.subr.bf16.mxu0 0
        %2190 = vmatpush2.bf16.msra.mxu0 0
        %2191 = vmatprep.mubr.bf16.mxu0 0
        %2192 = vmatmul.mubr.bf16.gmra.mxu0 %v2089
        %v2193 = vpop.f32.mrf.mxu0
        %v2194 = vadd.f32 %v2110, %v2193
        %v2195 = vpop.f32.mrf.mxu0
        %v2196 = vpop.f32.mrf.mxu0
        %v2197 = vpop.f32.mrf.mxu0
        %2198 = vdwg.mxu0
        %vm2199 = vcmp.ge.f32.partialorder %v2194, 0.0
        %v2200 = vmul.f32 %v2194, 0.01
        %v2201 = vsel %vm2199, %v2194, %v2200
        %s2202 = sld [smem:[#allocation2]]
        %v2203 = vld [vmem:[%s421] sm:$0xff]
        %v2204 = vstv %s2202
        %v2205 = vmul.f32 %v2204, %v2203
        %v2206 = vadd.f32 %v2201, %v2205
        %2207 = vst [vmem:[%s468] sm:$0xff] %v2206
        %s2208 = sand.u32 %s224, 1
        %s2209 = scalar_lea.sflag [#allocation5], %s2208
        %s2210 = sand.u32 %s224, 1
        %s2211 = smul.addr %s2210, 8
        %s2212 = scalar_lea.vmem [#allocation14], %s2211
        // Predicated region
        $region81: #{pointnet_forward.1} parent=51 // pred_check
          %p2213 = pneg %p234
        $region82: #{pointnet_forward.1} parent=51 // pred_check_branch
          %2215 = sbr.rel (%p2213) target = $region84
        $region83: #{pointnet_forward.1} parent=51 // pred_region
          %s2217 = ssub.s32 128, 128
          %2218 = vsyncadd %s2209, %s2217
          %s2219 = smul.addr %s28, 128
          %s2220 = scalar_lea.hbm %s8, %s2219
          %s2222 = sshll.u32 %s2212, 4
          %s2223 = int_to_ptr.vmem [resolvable:$true] %s2222
          %2225 = dma.vmem_to_hbm [thread:$0]  %s2223, 128, %s2220, %s2209
        $region84: #{pointnet_forward.1} parent=51 // pred_fallthru
          _
      $region52: #{pointnet_forward.1} parent=5 // pred_fallthru
        _
      %p2226 = scmp.le.s32.totalorder 2, %s23
      // Predicated region
      $region85: #{pointnet_forward.1} parent=5 // pred_check
        %p2227 = pneg %p2226
      $region86: #{pointnet_forward.1} parent=5 // pred_check_branch
        %2229 = sbr.rel (%p2227) target = $region88
      $region87: #{pointnet_forward.1} parent=5 // pred_region
        %s2230 = ssub.s32 %s23, 2
        // Predicated region
        $region89: #{pointnet_forward.1} parent=87 // pred_check
          %p2231 = pneg %p240
        $region90: #{pointnet_forward.1} parent=87 // pred_check_branch
          %2233 = sbr.rel (%p2231) target = $region92
        $region91: #{pointnet_forward.1} parent=87 // pred_region
          %s2234 = sand.u32 %s225, 1
          %s2235 = scalar_lea.sflag [#allocation5], %s2234
          %s2236 = sand.u32 %s225, 1
          %s2237 = smul.addr %s2236, 8
          %s2238 = scalar_lea.vmem [#allocation14], %s2237
          %2239 = dma.done %s2235, 128
        $region92: #{pointnet_forward.1} parent=87 // pred_fallthru
          _
      $region88: #{pointnet_forward.1} parent=5 // pred_fallthru
        _
    $region6: #{pointnet_forward.1} parent=1 // loop_footer
      %s27 = sadd.s32 1, %s23
    $region7: #{pointnet_forward.1} parent=1 // loop_footer_branch
      %22 = sbr.rel target = $region3
    $region8: #{pointnet_forward.1} parent=1 // loop_exit
      _
    %2240 = vsyncpa [#allocation4], 1
    %s2241 = scalar_lea.sflag [#allocation4], 1
    %2242 = vsyncpa %s2241, 1
    %2243 = vsyncpa [#allocation7], 1
    %2244 = vsyncpa [#allocation10], 1
    %2245 = vsyncpa [#allocation5], 1
    %s2246 = scalar_lea.sflag [#allocation5], 1
    %2247 = vsyncpa %s2246, 1

</llo_original>
